<compile_context>
chip_gen: v6e
topology: v6e:2x2x1
jax: 0.10.0
libtpu: 0.0.40
codegen_flags: <defaults>
</compile_context>

<pallas_src>
import jax
import jax.numpy as jnp
from jax.experimental import pallas as pl
from jax.experimental.pallas import tpu as pltpu

# ---- small-but-faithful sizes ----------------------------------------------
BERT_H = 768        # bert-base hidden size (matches nn.Linear(768, 512))
FC_H = 512
VOCAB = 512         # stands in for len(tokenizer) (~21128) at small scale
BERT_VOCAB = 128    # synthetic token-embedding vocab for the BERT stand-in
B = 2
S = 8
DROPOUT_P = 0.5     # nn.Dropout() default

# Lane-dense vocab tile.  Toy case: one block == whole vocab => single grid step
# (no launch overhead, no fc recompute, no v7x per-core invariant re-fetch).
# At the real ~21128 vocab: pad the vocab dim to a multiple of 128 / VOCAB_BLK and
# use 2048-4096-wide blocks (>=85% of HBM roofline, fits v5e's 16 MiB scoped VMEM).
# TODO(synk): vocab padding + logits slicing for non-multiple-of-128 real vocab.
VOCAB_BLK = VOCAB if VOCAB <= 2048 else 2048
assert VOCAB % VOCAB_BLK == 0 and VOCAB_BLK % 128 == 0


# =============================================================================
# Fused head kernel (one pallas_call, no intermediate HBM round-trips):
#   out[:, blk] = (dropout(relu(x @ W_fc + b_fc))) @ W_fc1[:, blk] + b_fc1[blk]
# grid = (VOCAB // VOCAB_BLK,) over lane-dense vocab blocks ('parallel': blocks are
# fully independent).  For the toy vocab this is a single step.
# =============================================================================
def head_kernel(x_ref, mask_ref, w1_ref, b1_ref, w2_ref, b2_ref, o_ref):
    # fc (768 -> 512): bf16 operands, f32 accumulation on the MXU
    y = jnp.dot(x_ref[...], w1_ref[...], preferred_element_type=jnp.float32)
    y = jnp.maximum(y + b1_ref[...], 0.0)                       # + bias, F.relu (f32)
    # dropout (training mode): pre-scaled keep mask (0 or 1/(1-p)), f32 VPU math
    y = y * mask_ref[...].astype(jnp.float32)
    # fc1 (512 -> vocab block): bf16 operands, f32 accumulation, f32 bias add
    o_ref[...] = (jnp.dot(y.astype(w2_ref.dtype), w2_ref[...],
                          preferred_element_type=jnp.float32) + b2_ref[...])


def fused_head(x, mask, w1, b1, w2, b2):
    n, in_f = x.shape
    h = w1.shape[1]
    v = w2.shape[1]
    n_blk = pl.cdiv(v, VOCAB_BLK)

    # Advisory cost hint so XLA schedules the surrounding ops to overlap weight DMAs.
    flops = 2 * n * (in_f * h + h * v)
    bytes_accessed = (x.size * x.dtype.itemsize + mask.size * mask.dtype.itemsize
                      + w1.size * w1.dtype.itemsize + b1.size * b1.dtype.itemsize
                      + w2.size * w2.dtype.itemsize + b2.size * b2.dtype.itemsize
                      + n * v * 4)
    cost = pl.CostEstimate(flops=flops, transcendentals=0,
                           bytes_accessed=bytes_accessed)

    return pl.pallas_call(
        head_kernel,
        out_shape=jax.ShapeDtypeStruct((n, v), jnp.float32),
        grid=(n_blk,),
        in_specs=[
            pl.BlockSpec((n, in_f), lambda j: (0, 0)),        # x (grid-invariant, bf16)
            pl.BlockSpec((n, h), lambda j: (0, 0)),           # dropout keep-mask (bf16)
            pl.BlockSpec((in_f, h), lambda j: (0, 0)),        # fc weight (bf16)
            pl.BlockSpec((1, h), lambda j: (0, 0)),           # fc bias (f32)
            pl.BlockSpec((h, VOCAB_BLK), lambda j: (0, j)),   # fc1 weight block (bf16)
            pl.BlockSpec((1, VOCAB_BLK), lambda j: (0, j)),   # fc1 bias block (f32)
        ],
        out_specs=pl.BlockSpec((n, VOCAB_BLK), lambda j: (0, j)),
        compiler_params=pltpu.CompilerParams(
            dimension_semantics=("parallel",)),
        cost_estimate=cost,
    )(x, mask, w1, b1, w2, b2)


# =============================================================================
# Parameters & model wrapper (plain-JAX glue)
# =============================================================================
def init_params(key):
    ks = jax.random.split(key, 4)
    p = {}
    p["tok_emb"] = 0.02 * jax.random.normal(ks[0], (BERT_VOCAB, BERT_H), jnp.float32)
    p["pos_emb"] = 0.02 * jax.random.normal(ks[1], (S, BERT_H), jnp.float32)
    p["ln_g"] = jnp.ones((BERT_H,), jnp.float32)
    p["ln_b"] = jnp.zeros((BERT_H,), jnp.float32)
    # Head weights stored (in_features, out_features) — transposed w.r.t. nn.Linear —
    # and persisted in bf16 once so no per-forward weight cast hits HBM.
    p["fc_w"] = (0.02 * jax.random.normal(ks[2], (BERT_H, FC_H), jnp.float32)
                 ).astype(jnp.bfloat16)
    p["fc_b"] = jnp.zeros((1, FC_H), jnp.float32)
    p["fc1_w"] = (0.02 * jax.random.normal(ks[3], (FC_H, VOCAB), jnp.float32)
                  ).astype(jnp.bfloat16)
    p["fc1_b"] = jnp.zeros((1, VOCAB), jnp.float32)
    return p


def bert_stand_in(params, token_ids):
    # TODO(synk): the pretrained 'bert-base-chinese' 12-layer encoder checkpoint cannot
    # be loaded in-script; stand-in produces last_hidden_state (B, S, 768) from
    # token+position embeddings followed by LayerNorm (the BERT embedding front-end).
    h = params["tok_emb"][token_ids] + params["pos_emb"][None, :token_ids.shape[1], :]
    mu = jnp.mean(h, axis=-1, keepdims=True)
    var = jnp.var(h, axis=-1, keepdims=True)
    hn = (h - mu) * jax.lax.rsqrt(var + 1e-12)
    return hn * params["ln_g"] + params["ln_b"]


def bert_fc_forward(params, token_ids, rng_key, training=True):
    hidden = bert_stand_in(params, token_ids)                    # (B, S, 768) f32

    # fc / relu / dropout / fc1 act independently per position and the module returns
    # x[:, -1, :], so only the last position's hidden state contributes to pred.
    h_last = hidden[:, -1, :].astype(jnp.bfloat16)               # (B, 768) — tiny cast
    bsz = h_last.shape[0]

    keep = 1.0 - DROPOUT_P
    if training:
        # Per-forward dropout randomness (statistically equivalent to torch, not
        # bitwise-identical).  Pre-scaled mask values are exactly 0.0 or 2.0, so
        # bf16 is lossless and halves the mask DMA bytes.
        mask = (jax.random.bernoulli(rng_key, keep, (bsz, FC_H)).astype(jnp.float32)
                / keep).astype(jnp.bfloat16)
    else:
        mask = jnp.ones((bsz, FC_H), jnp.bfloat16)

    pred = fused_head(h_last, mask,
                      params["fc_w"], params["fc_b"],
                      params["fc1_w"], params["fc1_b"])
    return pred                                                  # (B, VOCAB), f32


if __name__ == "__main__":
    key = jax.random.PRNGKey(0)
    k_param, k_tok, k_drop = jax.random.split(key, 3)
    params = init_params(k_param)
    token_ids = jax.random.randint(k_tok, (B, S), 0, BERT_VOCAB, dtype=jnp.int32)

    out = bert_fc_forward(params, token_ids, k_drop, training=True)
    out = jax.block_until_ready(out)
    assert out.shape == (B, VOCAB) and out.dtype == jnp.float32
    assert bool(jnp.all(jnp.isfinite(out)))
    print("KERNEL_OK")
</pallas_src>

<mosaic_0001>
module attributes {stable_mosaic.version = 11 : i64} {
  func.func @head_kernel(%arg0: i32, %arg1: memref<2x768xbf16, #tpu.memory_space<vmem>>, %arg2: memref<2x512xbf16, #tpu.memory_space<vmem>>, %arg3: memref<768x512xbf16, #tpu.memory_space<vmem>>, %arg4: memref<1x512xf32, #tpu.memory_space<vmem>>, %arg5: memref<512x512xbf16, #tpu.memory_space<vmem>>, %arg6: memref<1x512xf32, #tpu.memory_space<vmem>>, %arg7: memref<2x512xf32, #tpu.memory_space<vmem>>) attributes {dimension_semantics = [#tpu.dimension_semantics<parallel>], iteration_bounds = array<i64: 1>, scalar_prefetch = 0 : i64, scratch_operands = 0 : i64, tpu.core_type = #tpu.core_type<tc>, window_params = [{pipeline_mode = #tpu.pipeline_mode<synchronous>, transform_indices = @transform_0, window_bounds = array<i64: 2, 768>}, {pipeline_mode = #tpu.pipeline_mode<synchronous>, transform_indices = @transform_1, window_bounds = array<i64: 2, 512>}, {pipeline_mode = #tpu.pipeline_mode<synchronous>, transform_indices = @transform_2, window_bounds = array<i64: 768, 512>}, {pipeline_mode = #tpu.pipeline_mode<synchronous>, transform_indices = @transform_3, window_bounds = array<i64: 1, 512>}, {transform_indices = @transform_4, window_bounds = array<i64: 512, 512>}, {transform_indices = @transform_5, window_bounds = array<i64: 1, 512>}, {transform_indices = @transform_6, window_bounds = array<i64: 2, 512>}]} {
    %c0 = arith.constant 0 : index
    %c0_0 = arith.constant 0 : index
    %0 = vector.load %arg1[%c0, %c0_0] : memref<2x768xbf16, #tpu.memory_space<vmem>>, vector<2x768xbf16>
    %c0_1 = arith.constant 0 : index
    %c0_2 = arith.constant 0 : index
    %1 = vector.load %arg3[%c0_1, %c0_2] : memref<768x512xbf16, #tpu.memory_space<vmem>>, vector<768x512xbf16>
    %cst = arith.constant dense<0.000000e+00> : vector<2x512xf32>
    %2 = tpu.matmul %0, %1, %cst {dimension_numbers = #tpu.dot_dimension_numbers<[1], [0], [0], [1], [0, 0, 1, 1], [], []>} : vector<2x768xbf16>, vector<768x512xbf16>, vector<2x512xf32> -> vector<2x512xf32>
    %c0_3 = arith.constant 0 : index
    %c0_4 = arith.constant 0 : index
    %3 = vector.load %arg4[%c0_3, %c0_4] : memref<1x512xf32, #tpu.memory_space<vmem>>, vector<1x512xf32>
    %4 = vector.broadcast %3 : vector<1x512xf32> to vector<2x512xf32>
    %5 = arith.addf %2, %4 : vector<2x512xf32>
    %cst_5 = arith.constant 0.000000e+00 : f32
    %6 = vector.broadcast %cst_5 : f32 to vector<2x512xf32>
    %7 = arith.maximumf %5, %6 : vector<2x512xf32>
    %c0_6 = arith.constant 0 : index
    %c0_7 = arith.constant 0 : index
    %8 = vector.load %arg2[%c0_6, %c0_7] : memref<2x512xbf16, #tpu.memory_space<vmem>>, vector<2x512xbf16>
    %9 = arith.extf %8 : vector<2x512xbf16> to vector<2x512xf32>
    %10 = arith.mulf %7, %9 : vector<2x512xf32>
    %11 = arith.truncf %10 : vector<2x512xf32> to vector<2x512xbf16>
    %c0_8 = arith.constant 0 : index
    %c0_9 = arith.constant 0 : index
    %12 = vector.load %arg5[%c0_8, %c0_9] : memref<512x512xbf16, #tpu.memory_space<vmem>>, vector<512x512xbf16>
    %cst_10 = arith.constant dense<0.000000e+00> : vector<2x512xf32>
    %13 = tpu.matmul %11, %12, %cst_10 {dimension_numbers = #tpu.dot_dimension_numbers<[1], [0], [0], [1], [0, 0, 1, 1], [], []>} : vector<2x512xbf16>, vector<512x512xbf16>, vector<2x512xf32> -> vector<2x512xf32>
    %c0_11 = arith.constant 0 : index
    %c0_12 = arith.constant 0 : index
    %14 = vector.load %arg6[%c0_11, %c0_12] : memref<1x512xf32, #tpu.memory_space<vmem>>, vector<1x512xf32>
    %15 = vector.broadcast %14 : vector<1x512xf32> to vector<2x512xf32>
    %16 = arith.addf %13, %15 : vector<2x512xf32>
    %c0_13 = arith.constant 0 : index
    %c0_14 = arith.constant 0 : index
    %17 = vector.load %arg7[%c0_13, %c0_14] : memref<2x512xf32, #tpu.memory_space<vmem>>, vector<2x512xf32>
    tpu.vector_store %arg7[%c0_13, %c0_14], %16 {strides = array<i32>} : memref<2x512xf32, #tpu.memory_space<vmem>>, vector<2x512xf32>,
    return
  }
  func.func @transform_0(%arg0: i32) -> (i32, i32) {
    %c0_i32 = arith.constant 0 : i32
    %c0_i32_0 = arith.constant 0 : i32
    %c0_i32_1 = arith.constant 0 : i32
    return %c0_i32, %c0_i32_0 : i32, i32
  }
  func.func @transform_1(%arg0: i32) -> (i32, i32) {
    %c0_i32 = arith.constant 0 : i32
    %c0_i32_0 = arith.constant 0 : i32
    %c0_i32_1 = arith.constant 0 : i32
    return %c0_i32, %c0_i32_0 : i32, i32
  }
  func.func @transform_2(%arg0: i32) -> (i32, i32) {
    %c0_i32 = arith.constant 0 : i32
    %c0_i32_0 = arith.constant 0 : i32
    %c0_i32_1 = arith.constant 0 : i32
    return %c0_i32, %c0_i32_0 : i32, i32
  }
  func.func @transform_3(%arg0: i32) -> (i32, i32) {
    %c0_i32 = arith.constant 0 : i32
    %c0_i32_0 = arith.constant 0 : i32
    %c0_i32_1 = arith.constant 0 : i32
    return %c0_i32, %c0_i32_0 : i32, i32
  }
  func.func @transform_4(%arg0: i32) -> (i32, i32) {
    %c0_i32 = arith.constant 0 : i32
    %c0_i32_0 = arith.constant 0 : i32
    return %c0_i32, %arg0 : i32, i32
  }
  func.func @transform_5(%arg0: i32) -> (i32, i32) {
    %c0_i32 = arith.constant 0 : i32
    %c0_i32_0 = arith.constant 0 : i32
    return %c0_i32, %arg0 : i32, i32
  }
  func.func @transform_6(%arg0: i32) -> (i32, i32) {
    %c0_i32 = arith.constant 0 : i32
    %c0_i32_0 = arith.constant 0 : i32
    return %c0_i32, %arg0 : i32, i32
  }
}

</mosaic_0001>

<llo_original>
// kernel: tpu_custom_call.1
$region0: #{tpu_custom_call.1}
  #allocation0 [shape = 'u32[]', space=smem, size = 0x4, offset = 0x4, fixed_abs, tag = 'smem constant byte address 0x4 - core index']
  #allocation1 [shape = 'u32[144,128]{1,0:T(1,128)}', space=vmem, size = 0x12000, scoped, tag = 'internal scratch']
  %s0 = inlined_call_operand.hbm [shape: bf16[2,768], index: 0, kind: input, shape index: {}]
  %s1 = inlined_call_operand.hbm [shape: bf16[2,512], index: 1, kind: input, shape index: {}]
  %s2 = inlined_call_operand.hbm [shape: bf16[768,512], index: 2, kind: input, shape index: {}]
  %s3 = inlined_call_operand.vmem [shape: f32[1,512], index: 3, kind: input, shape index: {}]
  %s4 = inlined_call_operand.hbm [shape: bf16[512,512], index: 4, kind: input, shape index: {}]
  %s5 = inlined_call_operand.vmem [shape: f32[1,512], index: 5, kind: input, shape index: {}]
  %s6 = inlined_call_operand.hbm [shape: f32[2,512], index: 6, kind: output, shape index: {}]
  %s7 = sld [smem:[#allocation0]]
  $region50: #{tpu_custom_call.1} parent=0
    _
  %s9 = ssub.s32 1, %s7
  %s10 = scalar_select 0, %s9, %s7
  $region1: #{tpu_custom_call.1} parent=0
    #allocation2 [shape = 'u8[3072]{0}', space=vmem, size = 0xc00, scoped, tag = 'input window, operand 0, single buffered']
    #allocation3 [shape = 's32[1]{0}', space=sflag, size = 0x4, scoped, tag = 'scoped memory for tpu_custom_call.1']
    #allocation4 [shape = 's32[1]{0}', space=sflag, size = 0x4, scoped, tag = 'scoped memory for tpu_custom_call.1']
    #allocation5 [shape = 'u8[2048]{0}', space=vmem, size = 0x800, scoped, tag = 'input window, operand 1, single buffered']
    #allocation6 [shape = 's32[1]{0}', space=sflag, size = 0x4, scoped, tag = 'scoped memory for tpu_custom_call.1']
    #allocation7 [shape = 'u8[786432]{0}', space=vmem, size = 0xc0000, scoped, tag = 'input window, operand 2, single buffered']
    #allocation8 [shape = 'u8[524288]{0}', space=vmem, size = 0x80000, scoped, tag = 'input window, operand 4, single buffered']
    #allocation9 [shape = 's32[1]{0}', space=sflag, size = 0x4, scoped, tag = 'scoped memory for tpu_custom_call.1']
    #allocation10 [shape = 'u8[4096]{0}', space=vmem, size = 0x1000, scoped, tag = 'output window, operand 0, single buffered']
    %11 = vsyncpa [#allocation3], 0
    %12 = vsyncpa [#allocation6], 0
    %13 = vsyncpa [#allocation9], 0
    %14 = vsyncpa [#allocation4], 0
    // Predicated region
    $region2: #{tpu_custom_call.1} parent=1 // pred_check
      _
    $region3: #{tpu_custom_call.1} parent=1 // pred_check_branch
      %16 = sbr.rel (0) target = $region5
    $region4: #{tpu_custom_call.1} parent=1 // pred_region
      %s18 = ssub.s32 96, 96
      %19 = vsyncadd [#allocation3], %s18
      %s21 = sshll.u32 [#allocation2], 4
      %s22 = int_to_ptr.vmem [resolvable:$true] %s21
      %24 = dma.hbm_to_vmem [thread:$0]  %s0, 96, %s22, [#allocation3]
    $region5: #{tpu_custom_call.1} parent=1 // pred_fallthru
      _
    // Predicated region
    $region6: #{tpu_custom_call.1} parent=1 // pred_check
      _
    $region7: #{tpu_custom_call.1} parent=1 // pred_check_branch
      %26 = sbr.rel (0) target = $region9
    $region8: #{tpu_custom_call.1} parent=1 // pred_region
      %s28 = ssub.s32 64, 64
      %29 = vsyncadd [#allocation6], %s28
      %s31 = sshll.u32 [#allocation5], 4
      %s32 = int_to_ptr.vmem [resolvable:$true] %s31
      %34 = dma.hbm_to_vmem [thread:$0]  %s1, 64, %s32, [#allocation6]
    $region9: #{tpu_custom_call.1} parent=1 // pred_fallthru
      _
    // Predicated region
    $region10: #{tpu_custom_call.1} parent=1 // pred_check
      _
    $region11: #{tpu_custom_call.1} parent=1 // pred_check_branch
      %36 = sbr.rel (0) target = $region13
    $region12: #{tpu_custom_call.1} parent=1 // pred_region
      %s38 = ssub.s32 24576, 24576
      %39 = vsyncadd [#allocation6], %s38
      %s40 = sshll.u32 [#allocation7], 4
      %s41 = int_to_ptr.vmem [resolvable:$true] %s40
      %46 = dma.hbm_to_vmem [thread:$0]  %s2, 24576, %s41, [#allocation6], 256, 256, 16
    $region13: #{tpu_custom_call.1} parent=1 // pred_fallthru
      _
    // Predicated region
    $region14: #{tpu_custom_call.1} parent=1 // pred_check
      _
    $region15: #{tpu_custom_call.1} parent=1 // pred_check_branch
      %48 = sbr.rel (0) target = $region17
    $region16: #{tpu_custom_call.1} parent=1 // pred_region
      _
    $region17: #{tpu_custom_call.1} parent=1 // pred_fallthru
      _
    // Predicated region
    $region18: #{tpu_custom_call.1} parent=1 // pred_check
      _
    $region19: #{tpu_custom_call.1} parent=1 // pred_check_branch
      %50 = sbr.rel (0) target = $region21
    $region20: #{tpu_custom_call.1} parent=1 // pred_region
      %s52 = ssub.s32 16384, 16384
      %53 = vsyncadd [#allocation9], %s52
      %s54 = sshll.u32 [#allocation8], 4
      %s55 = int_to_ptr.vmem [resolvable:$true] %s54
      %60 = dma.hbm_to_vmem [thread:$0]  %s4, 16384, %s55, [#allocation9], 256, 256, 16
    $region21: #{tpu_custom_call.1} parent=1 // pred_fallthru
      _
    // Predicated region
    $region22: #{tpu_custom_call.1} parent=1 // pred_check
      _
    $region23: #{tpu_custom_call.1} parent=1 // pred_check_branch
      %62 = sbr.rel (0) target = $region25
    $region24: #{tpu_custom_call.1} parent=1 // pred_region
      _
    $region25: #{tpu_custom_call.1} parent=1 // pred_fallthru
      _
    // Predicated region
    $region26: #{tpu_custom_call.1} parent=1 // pred_check
      _
    $region27: #{tpu_custom_call.1} parent=1 // pred_check_branch
      %64 = sbr.rel (0) target = $region29
    $region28: #{tpu_custom_call.1} parent=1 // pred_region
      %65 = dma.done [#allocation3], 96
    $region29: #{tpu_custom_call.1} parent=1 // pred_fallthru
      _
    // Predicated region
    $region30: #{tpu_custom_call.1} parent=1 // pred_check
      _
    $region31: #{tpu_custom_call.1} parent=1 // pred_check_branch
      %67 = sbr.rel (0) target = $region33
    $region32: #{tpu_custom_call.1} parent=1 // pred_region
      %68 = dma.done [#allocation6], 64
    $region33: #{tpu_custom_call.1} parent=1 // pred_fallthru
      _
    // Predicated region
    $region34: #{tpu_custom_call.1} parent=1 // pred_check
      _
    $region35: #{tpu_custom_call.1} parent=1 // pred_check_branch
      %70 = sbr.rel (0) target = $region37
    $region36: #{tpu_custom_call.1} parent=1 // pred_region
      %71 = dma.done [#allocation6], 24576
    $region37: #{tpu_custom_call.1} parent=1 // pred_fallthru
      _
    // Predicated region
    $region38: #{tpu_custom_call.1} parent=1 // pred_check
      _
    $region39: #{tpu_custom_call.1} parent=1 // pred_check_branch
      %73 = sbr.rel (0) target = $region41
    $region40: #{tpu_custom_call.1} parent=1 // pred_region
      %74 = dma.done [#allocation9], 16384
    $region41: #{tpu_custom_call.1} parent=1 // pred_fallthru
      _
    %v75 = vld [vmem:[#allocation2] sm:$0x3f]
    %v76 = vld [vmem:[#allocation7] sm:$0xff]
    %v77 = vld [vmem:[#allocation7 + $0x8] sm:$0xff]
    %v78 = vld [vmem:[#allocation7 + $0x10] sm:$0xff]
    %v79 = vld [vmem:[#allocation7 + $0x18] sm:$0xff]
    %v80 = vld [vmem:[#allocation7 + $0x20] sm:$0xff]
    %v81 = vld [vmem:[#allocation7 + $0x28] sm:$0xff]
    %v82 = vld [vmem:[#allocation7 + $0x30] sm:$0xff]
    %v83 = vld [vmem:[#allocation7 + $0x38] sm:$0xff]
    %v84 = vld [vmem:[#allocation7 + $0x40] sm:$0xff]
    %v85 = vld [vmem:[#allocation7 + $0x48] sm:$0xff]
    %v86 = vld [vmem:[#allocation7 + $0x50] sm:$0xff]
    %v87 = vld [vmem:[#allocation7 + $0x58] sm:$0xff]
    %v88 = vld [vmem:[#allocation7 + $0x60] sm:$0xff]
    %v89 = vld [vmem:[#allocation7 + $0x68] sm:$0xff]
    %v90 = vld [vmem:[#allocation7 + $0x70] sm:$0xff]
    %v91 = vld [vmem:[#allocation7 + $0x78] sm:$0xff]
    %v92 = vld [vmem:[#allocation7 + $0x80] sm:$0xff]
    %v93 = vld [vmem:[#allocation7 + $0x88] sm:$0xff]
    %v94 = vld [vmem:[#allocation7 + $0x90] sm:$0xff]
    %v95 = vld [vmem:[#allocation7 + $0x98] sm:$0xff]
    %v96 = vld [vmem:[#allocation7 + $0xa0] sm:$0xff]
    %v97 = vld [vmem:[#allocation7 + $0xa8] sm:$0xff]
    %v98 = vld [vmem:[#allocation7 + $0xb0] sm:$0xff]
    %v99 = vld [vmem:[#allocation7 + $0xb8] sm:$0xff]
    %v100 = vld [vmem:[#allocation7 + $0xc0] sm:$0xff]
    %v101 = vld [vmem:[#allocation7 + $0xc8] sm:$0xff]
    %v102 = vld [vmem:[#allocation7 + $0xd0] sm:$0xff]
    %v103 = vld [vmem:[#allocation7 + $0xd8] sm:$0xff]
    %v104 = vld [vmem:[#allocation7 + $0xe0] sm:$0xff]
    %v105 = vld [vmem:[#allocation7 + $0xe8] sm:$0xff]
    %v106 = vld [vmem:[#allocation7 + $0xf0] sm:$0xff]
    %v107 = vld [vmem:[#allocation7 + $0xf8] sm:$0xff]
    %v108 = vld [vmem:[#allocation7 + $0x100] sm:$0xff]
    %v109 = vld [vmem:[#allocation7 + $0x108] sm:$0xff]
    %v110 = vld [vmem:[#allocation7 + $0x110] sm:$0xff]
    %v111 = vld [vmem:[#allocation7 + $0x118] sm:$0xff]
    %v112 = vld [vmem:[#allocation7 + $0x120] sm:$0xff]
    %v113 = vld [vmem:[#allocation7 + $0x128] sm:$0xff]
    %v114 = vld [vmem:[#allocation7 + $0x130] sm:$0xff]
    %v115 = vld [vmem:[#allocation7 + $0x138] sm:$0xff]
    %v116 = vld [vmem:[#allocation7 + $0x140] sm:$0xff]
    %v117 = vld [vmem:[#allocation7 + $0x148] sm:$0xff]
    %v118 = vld [vmem:[#allocation7 + $0x150] sm:$0xff]
    %v119 = vld [vmem:[#allocation7 + $0x158] sm:$0xff]
    %v120 = vld [vmem:[#allocation7 + $0x160] sm:$0xff]
    %v121 = vld [vmem:[#allocation7 + $0x168] sm:$0xff]
    %v122 = vld [vmem:[#allocation7 + $0x170] sm:$0xff]
    %v123 = vld [vmem:[#allocation7 + $0x178] sm:$0xff]
    %v124 = vld [vmem:[#allocation7 + $0x180] sm:$0xff]
    %v125 = vld [vmem:[#allocation7 + $0x188] sm:$0xff]
    %v126 = vld [vmem:[#allocation7 + $0x190] sm:$0xff]
    %v127 = vld [vmem:[#allocation7 + $0x198] sm:$0xff]
    %v128 = vld [vmem:[#allocation7 + $0x1a0] sm:$0xff]
    %v129 = vld [vmem:[#allocation7 + $0x1a8] sm:$0xff]
    %v130 = vld [vmem:[#allocation7 + $0x1b0] sm:$0xff]
    %v131 = vld [vmem:[#allocation7 + $0x1b8] sm:$0xff]
    %v132 = vld [vmem:[#allocation7 + $0x1c0] sm:$0xff]
    %v133 = vld [vmem:[#allocation7 + $0x1c8] sm:$0xff]
    %v134 = vld [vmem:[#allocation7 + $0x1d0] sm:$0xff]
    %v135 = vld [vmem:[#allocation7 + $0x1d8] sm:$0xff]
    %v136 = vld [vmem:[#allocation7 + $0x1e0] sm:$0xff]
    %v137 = vld [vmem:[#allocation7 + $0x1e8] sm:$0xff]
    %v138 = vld [vmem:[#allocation7 + $0x1f0] sm:$0xff]
    %v139 = vld [vmem:[#allocation7 + $0x1f8] sm:$0xff]
    %v140 = vld [vmem:[#allocation7 + $0x200] sm:$0xff]
    %v141 = vld [vmem:[#allocation7 + $0x208] sm:$0xff]
    %v142 = vld [vmem:[#allocation7 + $0x210] sm:$0xff]
    %v143 = vld [vmem:[#allocation7 + $0x218] sm:$0xff]
    %v144 = vld [vmem:[#allocation7 + $0x220] sm:$0xff]
    %v145 = vld [vmem:[#allocation7 + $0x228] sm:$0xff]
    %v146 = vld [vmem:[#allocation7 + $0x230] sm:$0xff]
    %v147 = vld [vmem:[#allocation7 + $0x238] sm:$0xff]
    %v148 = vld [vmem:[#allocation7 + $0x240] sm:$0xff]
    %v149 = vld [vmem:[#allocation7 + $0x248] sm:$0xff]
    %v150 = vld [vmem:[#allocation7 + $0x250] sm:$0xff]
    %v151 = vld [vmem:[#allocation7 + $0x258] sm:$0xff]
    %v152 = vld [vmem:[#allocation7 + $0x260] sm:$0xff]
    %v153 = vld [vmem:[#allocation7 + $0x268] sm:$0xff]
    %v154 = vld [vmem:[#allocation7 + $0x270] sm:$0xff]
    %v155 = vld [vmem:[#allocation7 + $0x278] sm:$0xff]
    %v156 = vld [vmem:[#allocation7 + $0x280] sm:$0xff]
    %v157 = vld [vmem:[#allocation7 + $0x288] sm:$0xff]
    %v158 = vld [vmem:[#allocation7 + $0x290] sm:$0xff]
    %v159 = vld [vmem:[#allocation7 + $0x298] sm:$0xff]
    %v160 = vld [vmem:[#allocation7 + $0x2a0] sm:$0xff]
    %v161 = vld [vmem:[#allocation7 + $0x2a8] sm:$0xff]
    %v162 = vld [vmem:[#allocation7 + $0x2b0] sm:$0xff]
    %v163 = vld [vmem:[#allocation7 + $0x2b8] sm:$0xff]
    %v164 = vld [vmem:[#allocation7 + $0x2c0] sm:$0xff]
    %v165 = vld [vmem:[#allocation7 + $0x2c8] sm:$0xff]
    %v166 = vld [vmem:[#allocation7 + $0x2d0] sm:$0xff]
    %v167 = vld [vmem:[#allocation7 + $0x2d8] sm:$0xff]
    %v168 = vld [vmem:[#allocation7 + $0x2e0] sm:$0xff]
    %v169 = vld [vmem:[#allocation7 + $0x2e8] sm:$0xff]
    %v170 = vld [vmem:[#allocation7 + $0x2f0] sm:$0xff]
    %v171 = vld [vmem:[#allocation7 + $0x2f8] sm:$0xff]
    %v172 = vld [vmem:[#allocation7 + $0x300] sm:$0xff]
    %v173 = vld [vmem:[#allocation7 + $0x308] sm:$0xff]
    %v174 = vld [vmem:[#allocation7 + $0x310] sm:$0xff]
    %v175 = vld [vmem:[#allocation7 + $0x318] sm:$0xff]
    %v176 = vld [vmem:[#allocation7 + $0x320] sm:$0xff]
    %v177 = vld [vmem:[#allocation7 + $0x328] sm:$0xff]
    %v178 = vld [vmem:[#allocation7 + $0x330] sm:$0xff]
    %v179 = vld [vmem:[#allocation7 + $0x338] sm:$0xff]
    %v180 = vld [vmem:[#allocation7 + $0x340] sm:$0xff]
    %v181 = vld [vmem:[#allocation7 + $0x348] sm:$0xff]
    %v182 = vld [vmem:[#allocation7 + $0x350] sm:$0xff]
    %v183 = vld [vmem:[#allocation7 + $0x358] sm:$0xff]
    %v184 = vld [vmem:[#allocation7 + $0x360] sm:$0xff]
    %v185 = vld [vmem:[#allocation7 + $0x368] sm:$0xff]
    %v186 = vld [vmem:[#allocation7 + $0x370] sm:$0xff]
    %v187 = vld [vmem:[#allocation7 + $0x378] sm:$0xff]
    %v188 = vld [vmem:[#allocation7 + $0x380] sm:$0xff]
    %v189 = vld [vmem:[#allocation7 + $0x388] sm:$0xff]
    %v190 = vld [vmem:[#allocation7 + $0x390] sm:$0xff]
    %v191 = vld [vmem:[#allocation7 + $0x398] sm:$0xff]
    %v192 = vld [vmem:[#allocation7 + $0x3a0] sm:$0xff]
    %v193 = vld [vmem:[#allocation7 + $0x3a8] sm:$0xff]
    %v194 = vld [vmem:[#allocation7 + $0x3b0] sm:$0xff]
    %v195 = vld [vmem:[#allocation7 + $0x3b8] sm:$0xff]
    %v196 = vld [vmem:[#allocation7 + $0x3c0] sm:$0xff]
    %v197 = vld [vmem:[#allocation7 + $0x3c8] sm:$0xff]
    %v198 = vld [vmem:[#allocation7 + $0x3d0] sm:$0xff]
    %v199 = vld [vmem:[#allocation7 + $0x3d8] sm:$0xff]
    %v200 = vld [vmem:[#allocation7 + $0x3e0] sm:$0xff]
    %v201 = vld [vmem:[#allocation7 + $0x3e8] sm:$0xff]
    %v202 = vld [vmem:[#allocation7 + $0x3f0] sm:$0xff]
    %v203 = vld [vmem:[#allocation7 + $0x3f8] sm:$0xff]
    %v204 = vld [vmem:[#allocation7 + $0x400] sm:$0xff]
    %v205 = vld [vmem:[#allocation7 + $0x408] sm:$0xff]
    %v206 = vld [vmem:[#allocation7 + $0x410] sm:$0xff]
    %v207 = vld [vmem:[#allocation7 + $0x418] sm:$0xff]
    %v208 = vld [vmem:[#allocation7 + $0x420] sm:$0xff]
    %v209 = vld [vmem:[#allocation7 + $0x428] sm:$0xff]
    %v210 = vld [vmem:[#allocation7 + $0x430] sm:$0xff]
    %v211 = vld [vmem:[#allocation7 + $0x438] sm:$0xff]
    %v212 = vld [vmem:[#allocation7 + $0x440] sm:$0xff]
    %v213 = vld [vmem:[#allocation7 + $0x448] sm:$0xff]
    %v214 = vld [vmem:[#allocation7 + $0x450] sm:$0xff]
    %v215 = vld [vmem:[#allocation7 + $0x458] sm:$0xff]
    %v216 = vld [vmem:[#allocation7 + $0x460] sm:$0xff]
    %v217 = vld [vmem:[#allocation7 + $0x468] sm:$0xff]
    %v218 = vld [vmem:[#allocation7 + $0x470] sm:$0xff]
    %v219 = vld [vmem:[#allocation7 + $0x478] sm:$0xff]
    %v220 = vld [vmem:[#allocation7 + $0x480] sm:$0xff]
    %v221 = vld [vmem:[#allocation7 + $0x488] sm:$0xff]
    %v222 = vld [vmem:[#allocation7 + $0x490] sm:$0xff]
    %v223 = vld [vmem:[#allocation7 + $0x498] sm:$0xff]
    %v224 = vld [vmem:[#allocation7 + $0x4a0] sm:$0xff]
    %v225 = vld [vmem:[#allocation7 + $0x4a8] sm:$0xff]
    %v226 = vld [vmem:[#allocation7 + $0x4b0] sm:$0xff]
    %v227 = vld [vmem:[#allocation7 + $0x4b8] sm:$0xff]
    %v228 = vld [vmem:[#allocation7 + $0x4c0] sm:$0xff]
    %v229 = vld [vmem:[#allocation7 + $0x4c8] sm:$0xff]
    %v230 = vld [vmem:[#allocation7 + $0x4d0] sm:$0xff]
    %v231 = vld [vmem:[#allocation7 + $0x4d8] sm:$0xff]
    %v232 = vld [vmem:[#allocation7 + $0x4e0] sm:$0xff]
    %v233 = vld [vmem:[#allocation7 + $0x4e8] sm:$0xff]
    %v234 = vld [vmem:[#allocation7 + $0x4f0] sm:$0xff]
    %v235 = vld [vmem:[#allocation7 + $0x4f8] sm:$0xff]
    %v236 = vld [vmem:[#allocation7 + $0x500] sm:$0xff]
    %v237 = vld [vmem:[#allocation7 + $0x508] sm:$0xff]
    %v238 = vld [vmem:[#allocation7 + $0x510] sm:$0xff]
    %v239 = vld [vmem:[#allocation7 + $0x518] sm:$0xff]
    %v240 = vld [vmem:[#allocation7 + $0x520] sm:$0xff]
    %v241 = vld [vmem:[#allocation7 + $0x528] sm:$0xff]
    %v242 = vld [vmem:[#allocation7 + $0x530] sm:$0xff]
    %v243 = vld [vmem:[#allocation7 + $0x538] sm:$0xff]
    %v244 = vld [vmem:[#allocation7 + $0x540] sm:$0xff]
    %v245 = vld [vmem:[#allocation7 + $0x548] sm:$0xff]
    %v246 = vld [vmem:[#allocation7 + $0x550] sm:$0xff]
    %v247 = vld [vmem:[#allocation7 + $0x558] sm:$0xff]
    %v248 = vld [vmem:[#allocation7 + $0x560] sm:$0xff]
    %v249 = vld [vmem:[#allocation7 + $0x568] sm:$0xff]
    %v250 = vld [vmem:[#allocation7 + $0x570] sm:$0xff]
    %v251 = vld [vmem:[#allocation7 + $0x578] sm:$0xff]
    %v252 = vld [vmem:[#allocation7 + $0x580] sm:$0xff]
    %v253 = vld [vmem:[#allocation7 + $0x588] sm:$0xff]
    %v254 = vld [vmem:[#allocation7 + $0x590] sm:$0xff]
    %v255 = vld [vmem:[#allocation7 + $0x598] sm:$0xff]
    %v256 = vld [vmem:[#allocation7 + $0x5a0] sm:$0xff]
    %v257 = vld [vmem:[#allocation7 + $0x5a8] sm:$0xff]
    %v258 = vld [vmem:[#allocation7 + $0x5b0] sm:$0xff]
    %v259 = vld [vmem:[#allocation7 + $0x5b8] sm:$0xff]
    %v260 = vld [vmem:[#allocation7 + $0x5c0] sm:$0xff]
    %v261 = vld [vmem:[#allocation7 + $0x5c8] sm:$0xff]
    %v262 = vld [vmem:[#allocation7 + $0x5d0] sm:$0xff]
    %v263 = vld [vmem:[#allocation7 + $0x5d8] sm:$0xff]
    %v264 = vld [vmem:[#allocation7 + $0x5e0] sm:$0xff]
    %v265 = vld [vmem:[#allocation7 + $0x5e8] sm:$0xff]
    %v266 = vld [vmem:[#allocation7 + $0x5f0] sm:$0xff]
    %v267 = vld [vmem:[#allocation7 + $0x5f8] sm:$0xff]
    %v268 = vld [vmem:[%s3] sm:$0xf]
    %v270 = vlaneseq
    %v271 = vshrl.u32 %v270, 7
    %v272 = vsub.s32 0, %v271
    %v273 = vrot.slane %v268, %v272
    %v274 = vlaneseq
    %v275 = vshrl.u32 %v274, 7
    %v276 = vsub.s32 1, %v275
    %v277 = vrot.slane %v268, %v276
    %v278 = vlaneseq
    %v279 = vshrl.u32 %v278, 7
    %v280 = vsub.s32 2, %v279
    %v281 = vrot.slane %v268, %v280
    %v282 = vlaneseq
    %v283 = vshrl.u32 %v282, 7
    %v284 = vsub.s32 3, %v283
    %v285 = vrot.slane %v268, %v284
    %v291 = vcombine.high %v75, %v75
    %v293 = vunpack.c.l.s4 1966171168
    %v294 = vunpack.c.0.s8 %v293
    %v295 = vlaneseq
    %v296 = vshrl.u32 %v295, 7
    %v297 = vsub.s32 %v294, %v296
    %v298 = vrot.slane %v75, %v297
    %v300 = vunpack.c.l.s4 1966171168
    %v301 = vunpack.c.0.s8 %v300
    %v302 = vlaneseq
    %v303 = vshrl.u32 %v302, 7
    %v304 = vsub.s32 %v301, %v303
    %v305 = vrot.slane %v291, %v304
    %v306 = vcombine.high %v298, %v298
    %v307 = vcombine.high %v305, %v305
    %v309 = vunpack.c.l.s4 1966171168
    %v310 = vunpack.c.0.s8 %v309
    %v311 = vlaneseq
    %v312 = vshrl.u32 %v311, 7
    %v313 = vsub.s32 %v310, %v312
    %v314 = vrot.slane %v298, %v313
    %v316 = vunpack.c.l.s4 1966171168
    %v317 = vunpack.c.0.s8 %v316
    %v318 = vlaneseq
    %v319 = vshrl.u32 %v318, 7
    %v320 = vsub.s32 %v317, %v319
    %v321 = vrot.slane %v305, %v320
    %v323 = vunpack.c.l.s4 1966171168
    %v324 = vunpack.c.0.s8 %v323
    %v325 = vlaneseq
    %v326 = vshrl.u32 %v325, 7
    %v327 = vsub.s32 %v324, %v326
    %v328 = vrot.slane %v306, %v327
    %v330 = vunpack.c.l.s4 1966171168
    %v331 = vunpack.c.0.s8 %v330
    %v332 = vlaneseq
    %v333 = vshrl.u32 %v332, 7
    %v334 = vsub.s32 %v331, %v333
    %v335 = vrot.slane %v307, %v334
    %v336 = vcombine.high %v314, %v314
    %v337 = vcombine.high %v328, %v328
    %v536 = vunpack.c.l.b16 %v76
    %v537 = vunpack.c.h.b16 %v76
    %v538 = vunpack.c.l.b16 %v77
    %v539 = vunpack.c.h.b16 %v77
    %v540 = vunpack.c.l.b16 %v78
    %v541 = vunpack.c.h.b16 %v78
    %v542 = vunpack.c.l.b16 %v79
    %v543 = vunpack.c.h.b16 %v79
    %v544 = vunpack.c.l.b16 %v80
    %v545 = vunpack.c.h.b16 %v80
    %v546 = vunpack.c.l.b16 %v81
    %v547 = vunpack.c.h.b16 %v81
    %v548 = vunpack.c.l.b16 %v82
    %v549 = vunpack.c.h.b16 %v82
    %v550 = vunpack.c.l.b16 %v83
    %v551 = vunpack.c.h.b16 %v83
    %v552 = vunpack.c.l.b16 %v84
    %v553 = vunpack.c.h.b16 %v84
    %v554 = vunpack.c.l.b16 %v85
    %v555 = vunpack.c.h.b16 %v85
    %v556 = vunpack.c.l.b16 %v86
    %v557 = vunpack.c.h.b16 %v86
    %v558 = vunpack.c.l.b16 %v87
    %v559 = vunpack.c.h.b16 %v87
    %v560 = vunpack.c.l.b16 %v88
    %v561 = vunpack.c.h.b16 %v88
    %v562 = vunpack.c.l.b16 %v89
    %v563 = vunpack.c.h.b16 %v89
    %v564 = vunpack.c.l.b16 %v90
    %v565 = vunpack.c.h.b16 %v90
    %v566 = vunpack.c.l.b16 %v91
    %v567 = vunpack.c.h.b16 %v91
    %v568 = vunpack.c.l.b16 %v92
    %v569 = vunpack.c.h.b16 %v92
    %v570 = vunpack.c.l.b16 %v93
    %v571 = vunpack.c.h.b16 %v93
    %v572 = vunpack.c.l.b16 %v94
    %v573 = vunpack.c.h.b16 %v94
    %v574 = vunpack.c.l.b16 %v95
    %v575 = vunpack.c.h.b16 %v95
    %v576 = vunpack.c.l.b16 %v96
    %v577 = vunpack.c.h.b16 %v96
    %v578 = vunpack.c.l.b16 %v97
    %v579 = vunpack.c.h.b16 %v97
    %v580 = vunpack.c.l.b16 %v98
    %v581 = vunpack.c.h.b16 %v98
    %v582 = vunpack.c.l.b16 %v99
    %v583 = vunpack.c.h.b16 %v99
    %v584 = vunpack.c.l.b16 %v100
    %v585 = vunpack.c.h.b16 %v100
    %v586 = vunpack.c.l.b16 %v101
    %v587 = vunpack.c.h.b16 %v101
    %v588 = vunpack.c.l.b16 %v102
    %v589 = vunpack.c.h.b16 %v102
    %v590 = vunpack.c.l.b16 %v103
    %v591 = vunpack.c.h.b16 %v103
    %v592 = vunpack.c.l.b16 %v104
    %v593 = vunpack.c.h.b16 %v104
    %v594 = vunpack.c.l.b16 %v105
    %v595 = vunpack.c.h.b16 %v105
    %v596 = vunpack.c.l.b16 %v106
    %v597 = vunpack.c.h.b16 %v106
    %v598 = vunpack.c.l.b16 %v107
    %v599 = vunpack.c.h.b16 %v107
    %v600 = vunpack.c.l.b16 %v108
    %v601 = vunpack.c.h.b16 %v108
    %v602 = vunpack.c.l.b16 %v109
    %v603 = vunpack.c.h.b16 %v109
    %v604 = vunpack.c.l.b16 %v110
    %v605 = vunpack.c.h.b16 %v110
    %v606 = vunpack.c.l.b16 %v111
    %v607 = vunpack.c.h.b16 %v111
    %v608 = vunpack.c.l.b16 %v112
    %v609 = vunpack.c.h.b16 %v112
    %v610 = vunpack.c.l.b16 %v113
    %v611 = vunpack.c.h.b16 %v113
    %v612 = vunpack.c.l.b16 %v114
    %v613 = vunpack.c.h.b16 %v114
    %v614 = vunpack.c.l.b16 %v115
    %v615 = vunpack.c.h.b16 %v115
    %v616 = vunpack.c.l.b16 %v116
    %v617 = vunpack.c.h.b16 %v116
    %v618 = vunpack.c.l.b16 %v117
    %v619 = vunpack.c.h.b16 %v117
    %v620 = vunpack.c.l.b16 %v118
    %v621 = vunpack.c.h.b16 %v118
    %v622 = vunpack.c.l.b16 %v119
    %v623 = vunpack.c.h.b16 %v119
    %v624 = vunpack.c.l.b16 %v120
    %v625 = vunpack.c.h.b16 %v120
    %v626 = vunpack.c.l.b16 %v121
    %v627 = vunpack.c.h.b16 %v121
    %v628 = vunpack.c.l.b16 %v122
    %v629 = vunpack.c.h.b16 %v122
    %v630 = vunpack.c.l.b16 %v123
    %v631 = vunpack.c.h.b16 %v123
    %v632 = vunpack.c.l.b16 %v124
    %v633 = vunpack.c.h.b16 %v124
    %v634 = vunpack.c.l.b16 %v125
    %v635 = vunpack.c.h.b16 %v125
    %v636 = vunpack.c.l.b16 %v126
    %v637 = vunpack.c.h.b16 %v126
    %v638 = vunpack.c.l.b16 %v127
    %v639 = vunpack.c.h.b16 %v127
    %v640 = vunpack.c.l.b16 %v128
    %v641 = vunpack.c.h.b16 %v128
    %v642 = vunpack.c.l.b16 %v129
    %v643 = vunpack.c.h.b16 %v129
    %v644 = vunpack.c.l.b16 %v130
    %v645 = vunpack.c.h.b16 %v130
    %v646 = vunpack.c.l.b16 %v131
    %v647 = vunpack.c.h.b16 %v131
    %v648 = vunpack.c.l.b16 %v132
    %v649 = vunpack.c.h.b16 %v132
    %v650 = vunpack.c.l.b16 %v133
    %v651 = vunpack.c.h.b16 %v133
    %v652 = vunpack.c.l.b16 %v134
    %v653 = vunpack.c.h.b16 %v134
    %v654 = vunpack.c.l.b16 %v135
    %v655 = vunpack.c.h.b16 %v135
    %v656 = vunpack.c.l.b16 %v136
    %v657 = vunpack.c.h.b16 %v136
    %v658 = vunpack.c.l.b16 %v137
    %v659 = vunpack.c.h.b16 %v137
    %v660 = vunpack.c.l.b16 %v138
    %v661 = vunpack.c.h.b16 %v138
    %v662 = vunpack.c.l.b16 %v139
    %v663 = vunpack.c.h.b16 %v139
    %v664 = vunpack.c.l.b16 %v140
    %v665 = vunpack.c.h.b16 %v140
    %v666 = vunpack.c.l.b16 %v141
    %v667 = vunpack.c.h.b16 %v141
    %v668 = vunpack.c.l.b16 %v142
    %v669 = vunpack.c.h.b16 %v142
    %v670 = vunpack.c.l.b16 %v143
    %v671 = vunpack.c.h.b16 %v143
    %v672 = vunpack.c.l.b16 %v144
    %v673 = vunpack.c.h.b16 %v144
    %v674 = vunpack.c.l.b16 %v145
    %v675 = vunpack.c.h.b16 %v145
    %v676 = vunpack.c.l.b16 %v146
    %v677 = vunpack.c.h.b16 %v146
    %v678 = vunpack.c.l.b16 %v147
    %v679 = vunpack.c.h.b16 %v147
    %v680 = vunpack.c.l.b16 %v148
    %v681 = vunpack.c.h.b16 %v148
    %v682 = vunpack.c.l.b16 %v149
    %v683 = vunpack.c.h.b16 %v149
    %v684 = vunpack.c.l.b16 %v150
    %v685 = vunpack.c.h.b16 %v150
    %v686 = vunpack.c.l.b16 %v151
    %v687 = vunpack.c.h.b16 %v151
    %v688 = vunpack.c.l.b16 %v152
    %v689 = vunpack.c.h.b16 %v152
    %v690 = vunpack.c.l.b16 %v153
    %v691 = vunpack.c.h.b16 %v153
    %v692 = vunpack.c.l.b16 %v154
    %v693 = vunpack.c.h.b16 %v154
    %v694 = vunpack.c.l.b16 %v155
    %v695 = vunpack.c.h.b16 %v155
    %v696 = vunpack.c.l.b16 %v156
    %v697 = vunpack.c.h.b16 %v156
    %v698 = vunpack.c.l.b16 %v157
    %v699 = vunpack.c.h.b16 %v157
    %v700 = vunpack.c.l.b16 %v158
    %v701 = vunpack.c.h.b16 %v158
    %v702 = vunpack.c.l.b16 %v159
    %v703 = vunpack.c.h.b16 %v159
    %v704 = vunpack.c.l.b16 %v160
    %v705 = vunpack.c.h.b16 %v160
    %v706 = vunpack.c.l.b16 %v161
    %v707 = vunpack.c.h.b16 %v161
    %v708 = vunpack.c.l.b16 %v162
    %v709 = vunpack.c.h.b16 %v162
    %v710 = vunpack.c.l.b16 %v163
    %v711 = vunpack.c.h.b16 %v163
    %v712 = vunpack.c.l.b16 %v164
    %v713 = vunpack.c.h.b16 %v164
    %v714 = vunpack.c.l.b16 %v165
    %v715 = vunpack.c.h.b16 %v165
    %v716 = vunpack.c.l.b16 %v166
    %v717 = vunpack.c.h.b16 %v166
    %v718 = vunpack.c.l.b16 %v167
    %v719 = vunpack.c.h.b16 %v167
    %v720 = vunpack.c.l.b16 %v168
    %v721 = vunpack.c.h.b16 %v168
    %v722 = vunpack.c.l.b16 %v169
    %v723 = vunpack.c.h.b16 %v169
    %v724 = vunpack.c.l.b16 %v170
    %v725 = vunpack.c.h.b16 %v170
    %v726 = vunpack.c.l.b16 %v171
    %v727 = vunpack.c.h.b16 %v171
    %v728 = vunpack.c.l.b16 %v172
    %v729 = vunpack.c.h.b16 %v172
    %v730 = vunpack.c.l.b16 %v173
    %v731 = vunpack.c.h.b16 %v173
    %v732 = vunpack.c.l.b16 %v174
    %v733 = vunpack.c.h.b16 %v174
    %v734 = vunpack.c.l.b16 %v175
    %v735 = vunpack.c.h.b16 %v175
    %v736 = vunpack.c.l.b16 %v176
    %v737 = vunpack.c.h.b16 %v176
    %v738 = vunpack.c.l.b16 %v177
    %v739 = vunpack.c.h.b16 %v177
    %v740 = vunpack.c.l.b16 %v178
    %v741 = vunpack.c.h.b16 %v178
    %v742 = vunpack.c.l.b16 %v179
    %v743 = vunpack.c.h.b16 %v179
    %v744 = vunpack.c.l.b16 %v180
    %v745 = vunpack.c.h.b16 %v180
    %v746 = vunpack.c.l.b16 %v181
    %v747 = vunpack.c.h.b16 %v181
    %v748 = vunpack.c.l.b16 %v182
    %v749 = vunpack.c.h.b16 %v182
    %v750 = vunpack.c.l.b16 %v183
    %v751 = vunpack.c.h.b16 %v183
    %v752 = vunpack.c.l.b16 %v184
    %v753 = vunpack.c.h.b16 %v184
    %v754 = vunpack.c.l.b16 %v185
    %v755 = vunpack.c.h.b16 %v185
    %v756 = vunpack.c.l.b16 %v186
    %v757 = vunpack.c.h.b16 %v186
    %v758 = vunpack.c.l.b16 %v187
    %v759 = vunpack.c.h.b16 %v187
    %v760 = vunpack.c.l.b16 %v188
    %v761 = vunpack.c.h.b16 %v188
    %v762 = vunpack.c.l.b16 %v189
    %v763 = vunpack.c.h.b16 %v189
    %v764 = vunpack.c.l.b16 %v190
    %v765 = vunpack.c.h.b16 %v190
    %v766 = vunpack.c.l.b16 %v191
    %v767 = vunpack.c.h.b16 %v191
    %v768 = vunpack.c.l.b16 %v192
    %v769 = vunpack.c.h.b16 %v192
    %v770 = vunpack.c.l.b16 %v193
    %v771 = vunpack.c.h.b16 %v193
    %v772 = vunpack.c.l.b16 %v194
    %v773 = vunpack.c.h.b16 %v194
    %v774 = vunpack.c.l.b16 %v195
    %v775 = vunpack.c.h.b16 %v195
    %v776 = vunpack.c.l.b16 %v196
    %v777 = vunpack.c.h.b16 %v196
    %v778 = vunpack.c.l.b16 %v197
    %v779 = vunpack.c.h.b16 %v197
    %v780 = vunpack.c.l.b16 %v198
    %v781 = vunpack.c.h.b16 %v198
    %v782 = vunpack.c.l.b16 %v199
    %v783 = vunpack.c.h.b16 %v199
    %v784 = vunpack.c.l.b16 %v200
    %v785 = vunpack.c.h.b16 %v200
    %v786 = vunpack.c.l.b16 %v201
    %v787 = vunpack.c.h.b16 %v201
    %v788 = vunpack.c.l.b16 %v202
    %v789 = vunpack.c.h.b16 %v202
    %v790 = vunpack.c.l.b16 %v203
    %v791 = vunpack.c.h.b16 %v203
    %v792 = vunpack.c.l.b16 %v204
    %v793 = vunpack.c.h.b16 %v204
    %v794 = vunpack.c.l.b16 %v205
    %v795 = vunpack.c.h.b16 %v205
    %v796 = vunpack.c.l.b16 %v206
    %v797 = vunpack.c.h.b16 %v206
    %v798 = vunpack.c.l.b16 %v207
    %v799 = vunpack.c.h.b16 %v207
    %v800 = vunpack.c.l.b16 %v208
    %v801 = vunpack.c.h.b16 %v208
    %v802 = vunpack.c.l.b16 %v209
    %v803 = vunpack.c.h.b16 %v209
    %v804 = vunpack.c.l.b16 %v210
    %v805 = vunpack.c.h.b16 %v210
    %v806 = vunpack.c.l.b16 %v211
    %v807 = vunpack.c.h.b16 %v211
    %v808 = vunpack.c.l.b16 %v212
    %v809 = vunpack.c.h.b16 %v212
    %v810 = vunpack.c.l.b16 %v213
    %v811 = vunpack.c.h.b16 %v213
    %v812 = vunpack.c.l.b16 %v214
    %v813 = vunpack.c.h.b16 %v214
    %v814 = vunpack.c.l.b16 %v215
    %v815 = vunpack.c.h.b16 %v215
    %v816 = vunpack.c.l.b16 %v216
    %v817 = vunpack.c.h.b16 %v216
    %v818 = vunpack.c.l.b16 %v217
    %v819 = vunpack.c.h.b16 %v217
    %v820 = vunpack.c.l.b16 %v218
    %v821 = vunpack.c.h.b16 %v218
    %v822 = vunpack.c.l.b16 %v219
    %v823 = vunpack.c.h.b16 %v219
    %v824 = vunpack.c.l.b16 %v220
    %v825 = vunpack.c.h.b16 %v220
    %v826 = vunpack.c.l.b16 %v221
    %v827 = vunpack.c.h.b16 %v221
    %v828 = vunpack.c.l.b16 %v222
    %v829 = vunpack.c.h.b16 %v222
    %v830 = vunpack.c.l.b16 %v223
    %v831 = vunpack.c.h.b16 %v223
    %v832 = vunpack.c.l.b16 %v224
    %v833 = vunpack.c.h.b16 %v224
    %v834 = vunpack.c.l.b16 %v225
    %v835 = vunpack.c.h.b16 %v225
    %v836 = vunpack.c.l.b16 %v226
    %v837 = vunpack.c.h.b16 %v226
    %v838 = vunpack.c.l.b16 %v227
    %v839 = vunpack.c.h.b16 %v227
    %v840 = vunpack.c.l.b16 %v228
    %v841 = vunpack.c.h.b16 %v228
    %v842 = vunpack.c.l.b16 %v229
    %v843 = vunpack.c.h.b16 %v229
    %v844 = vunpack.c.l.b16 %v230
    %v845 = vunpack.c.h.b16 %v230
    %v846 = vunpack.c.l.b16 %v231
    %v847 = vunpack.c.h.b16 %v231
    %v848 = vunpack.c.l.b16 %v232
    %v849 = vunpack.c.h.b16 %v232
    %v850 = vunpack.c.l.b16 %v233
    %v851 = vunpack.c.h.b16 %v233
    %v852 = vunpack.c.l.b16 %v234
    %v853 = vunpack.c.h.b16 %v234
    %v854 = vunpack.c.l.b16 %v235
    %v855 = vunpack.c.h.b16 %v235
    %v856 = vunpack.c.l.b16 %v236
    %v857 = vunpack.c.h.b16 %v236
    %v858 = vunpack.c.l.b16 %v237
    %v859 = vunpack.c.h.b16 %v237
    %v860 = vunpack.c.l.b16 %v238
    %v861 = vunpack.c.h.b16 %v238
    %v862 = vunpack.c.l.b16 %v239
    %v863 = vunpack.c.h.b16 %v239
    %v864 = vunpack.c.l.b16 %v240
    %v865 = vunpack.c.h.b16 %v240
    %v866 = vunpack.c.l.b16 %v241
    %v867 = vunpack.c.h.b16 %v241
    %v868 = vunpack.c.l.b16 %v242
    %v869 = vunpack.c.h.b16 %v242
    %v870 = vunpack.c.l.b16 %v243
    %v871 = vunpack.c.h.b16 %v243
    %v872 = vunpack.c.l.b16 %v244
    %v873 = vunpack.c.h.b16 %v244
    %v874 = vunpack.c.l.b16 %v245
    %v875 = vunpack.c.h.b16 %v245
    %v876 = vunpack.c.l.b16 %v246
    %v877 = vunpack.c.h.b16 %v246
    %v878 = vunpack.c.l.b16 %v247
    %v879 = vunpack.c.h.b16 %v247
    %v880 = vunpack.c.l.b16 %v248
    %v881 = vunpack.c.h.b16 %v248
    %v882 = vunpack.c.l.b16 %v249
    %v883 = vunpack.c.h.b16 %v249
    %v884 = vunpack.c.l.b16 %v250
    %v885 = vunpack.c.h.b16 %v250
    %v886 = vunpack.c.l.b16 %v251
    %v887 = vunpack.c.h.b16 %v251
    %v888 = vunpack.c.l.b16 %v252
    %v889 = vunpack.c.h.b16 %v252
    %v890 = vunpack.c.l.b16 %v253
    %v891 = vunpack.c.h.b16 %v253
    %v892 = vunpack.c.l.b16 %v254
    %v893 = vunpack.c.h.b16 %v254
    %v894 = vunpack.c.l.b16 %v255
    %v895 = vunpack.c.h.b16 %v255
    %v896 = vunpack.c.l.b16 %v256
    %v897 = vunpack.c.h.b16 %v256
    %v898 = vunpack.c.l.b16 %v257
    %v899 = vunpack.c.h.b16 %v257
    %v900 = vunpack.c.l.b16 %v258
    %v901 = vunpack.c.h.b16 %v258
    %v902 = vunpack.c.l.b16 %v259
    %v903 = vunpack.c.h.b16 %v259
    %v904 = vunpack.c.l.b16 %v260
    %v905 = vunpack.c.h.b16 %v260
    %v906 = vunpack.c.l.b16 %v261
    %v907 = vunpack.c.h.b16 %v261
    %v908 = vunpack.c.l.b16 %v262
    %v909 = vunpack.c.h.b16 %v262
    %v910 = vunpack.c.l.b16 %v263
    %v911 = vunpack.c.h.b16 %v263
    %v912 = vunpack.c.l.b16 %v264
    %v913 = vunpack.c.h.b16 %v264
    %v914 = vunpack.c.l.b16 %v265
    %v915 = vunpack.c.h.b16 %v265
    %v916 = vunpack.c.l.b16 %v266
    %v917 = vunpack.c.h.b16 %v266
    %v918 = vunpack.c.l.b16 %v267
    %v919 = vunpack.c.h.b16 %v267
    %v920 = vpack.c.b16 %v540, %v536
    %v921 = vpack.c.b16 %v541, %v537
    %v922 = vpack.c.b16 %v542, %v538
    %v923 = vpack.c.b16 %v543, %v539
    %v924 = vpack.c.b16 %v548, %v544
    %v925 = vpack.c.b16 %v549, %v545
    %v926 = vpack.c.b16 %v550, %v546
    %v927 = vpack.c.b16 %v551, %v547
    %v928 = vpack.c.b16 %v556, %v552
    %v929 = vpack.c.b16 %v557, %v553
    %v930 = vpack.c.b16 %v558, %v554
    %v931 = vpack.c.b16 %v559, %v555
    %v932 = vpack.c.b16 %v564, %v560
    %v933 = vpack.c.b16 %v565, %v561
    %v934 = vpack.c.b16 %v566, %v562
    %v935 = vpack.c.b16 %v567, %v563
    %v936 = vpack.c.b16 %v572, %v568
    %v937 = vpack.c.b16 %v573, %v569
    %v938 = vpack.c.b16 %v574, %v570
    %v939 = vpack.c.b16 %v575, %v571
    %v940 = vpack.c.b16 %v580, %v576
    %v941 = vpack.c.b16 %v581, %v577
    %v942 = vpack.c.b16 %v582, %v578
    %v943 = vpack.c.b16 %v583, %v579
    %v944 = vpack.c.b16 %v588, %v584
    %v945 = vpack.c.b16 %v589, %v585
    %v946 = vpack.c.b16 %v590, %v586
    %v947 = vpack.c.b16 %v591, %v587
    %v948 = vpack.c.b16 %v596, %v592
    %v949 = vpack.c.b16 %v597, %v593
    %v950 = vpack.c.b16 %v598, %v594
    %v951 = vpack.c.b16 %v599, %v595
    %v952 = vpack.c.b16 %v604, %v600
    %v953 = vpack.c.b16 %v605, %v601
    %v954 = vpack.c.b16 %v606, %v602
    %v955 = vpack.c.b16 %v607, %v603
    %v956 = vpack.c.b16 %v612, %v608
    %v957 = vpack.c.b16 %v613, %v609
    %v958 = vpack.c.b16 %v614, %v610
    %v959 = vpack.c.b16 %v615, %v611
    %v960 = vpack.c.b16 %v620, %v616
    %v961 = vpack.c.b16 %v621, %v617
    %v962 = vpack.c.b16 %v622, %v618
    %v963 = vpack.c.b16 %v623, %v619
    %v964 = vpack.c.b16 %v628, %v624
    %v965 = vpack.c.b16 %v629, %v625
    %v966 = vpack.c.b16 %v630, %v626
    %v967 = vpack.c.b16 %v631, %v627
    %v968 = vpack.c.b16 %v636, %v632
    %v969 = vpack.c.b16 %v637, %v633
    %v970 = vpack.c.b16 %v638, %v634
    %v971 = vpack.c.b16 %v639, %v635
    %v972 = vpack.c.b16 %v644, %v640
    %v973 = vpack.c.b16 %v645, %v641
    %v974 = vpack.c.b16 %v646, %v642
    %v975 = vpack.c.b16 %v647, %v643
    %v976 = vpack.c.b16 %v652, %v648
    %v977 = vpack.c.b16 %v653, %v649
    %v978 = vpack.c.b16 %v654, %v650
    %v979 = vpack.c.b16 %v655, %v651
    %v980 = vpack.c.b16 %v660, %v656
    %v981 = vpack.c.b16 %v661, %v657
    %v982 = vpack.c.b16 %v662, %v658
    %v983 = vpack.c.b16 %v663, %v659
    %v984 = vpack.c.b16 %v668, %v664
    %v985 = vpack.c.b16 %v669, %v665
    %v986 = vpack.c.b16 %v670, %v666
    %v987 = vpack.c.b16 %v671, %v667
    %v988 = vpack.c.b16 %v676, %v672
    %v989 = vpack.c.b16 %v677, %v673
    %v990 = vpack.c.b16 %v678, %v674
    %v991 = vpack.c.b16 %v679, %v675
    %v992 = vpack.c.b16 %v684, %v680
    %v993 = vpack.c.b16 %v685, %v681
    %v994 = vpack.c.b16 %v686, %v682
    %v995 = vpack.c.b16 %v687, %v683
    %v996 = vpack.c.b16 %v692, %v688
    %v997 = vpack.c.b16 %v693, %v689
    %v998 = vpack.c.b16 %v694, %v690
    %v999 = vpack.c.b16 %v695, %v691
    %v1000 = vpack.c.b16 %v700, %v696
    %v1001 = vpack.c.b16 %v701, %v697
    %v1002 = vpack.c.b16 %v702, %v698
    %v1003 = vpack.c.b16 %v703, %v699
    %v1004 = vpack.c.b16 %v708, %v704
    %v1005 = vpack.c.b16 %v709, %v705
    %v1006 = vpack.c.b16 %v710, %v706
    %v1007 = vpack.c.b16 %v711, %v707
    %v1008 = vpack.c.b16 %v716, %v712
    %v1009 = vpack.c.b16 %v717, %v713
    %v1010 = vpack.c.b16 %v718, %v714
    %v1011 = vpack.c.b16 %v719, %v715
    %v1012 = vpack.c.b16 %v724, %v720
    %v1013 = vpack.c.b16 %v725, %v721
    %v1014 = vpack.c.b16 %v726, %v722
    %v1015 = vpack.c.b16 %v727, %v723
    %v1016 = vpack.c.b16 %v732, %v728
    %v1017 = vpack.c.b16 %v733, %v729
    %v1018 = vpack.c.b16 %v734, %v730
    %v1019 = vpack.c.b16 %v735, %v731
    %v1020 = vpack.c.b16 %v740, %v736
    %v1021 = vpack.c.b16 %v741, %v737
    %v1022 = vpack.c.b16 %v742, %v738
    %v1023 = vpack.c.b16 %v743, %v739
    %v1024 = vpack.c.b16 %v748, %v744
    %v1025 = vpack.c.b16 %v749, %v745
    %v1026 = vpack.c.b16 %v750, %v746
    %v1027 = vpack.c.b16 %v751, %v747
    %v1028 = vpack.c.b16 %v756, %v752
    %v1029 = vpack.c.b16 %v757, %v753
    %v1030 = vpack.c.b16 %v758, %v754
    %v1031 = vpack.c.b16 %v759, %v755
    %v1032 = vpack.c.b16 %v764, %v760
    %v1033 = vpack.c.b16 %v765, %v761
    %v1034 = vpack.c.b16 %v766, %v762
    %v1035 = vpack.c.b16 %v767, %v763
    %v1036 = vpack.c.b16 %v772, %v768
    %v1037 = vpack.c.b16 %v773, %v769
    %v1038 = vpack.c.b16 %v774, %v770
    %v1039 = vpack.c.b16 %v775, %v771
    %v1040 = vpack.c.b16 %v780, %v776
    %v1041 = vpack.c.b16 %v781, %v777
    %v1042 = vpack.c.b16 %v782, %v778
    %v1043 = vpack.c.b16 %v783, %v779
    %v1044 = vpack.c.b16 %v788, %v784
    %v1045 = vpack.c.b16 %v789, %v785
    %v1046 = vpack.c.b16 %v790, %v786
    %v1047 = vpack.c.b16 %v791, %v787
    %v1048 = vpack.c.b16 %v796, %v792
    %v1049 = vpack.c.b16 %v797, %v793
    %v1050 = vpack.c.b16 %v798, %v794
    %v1051 = vpack.c.b16 %v799, %v795
    %v1052 = vpack.c.b16 %v804, %v800
    %v1053 = vpack.c.b16 %v805, %v801
    %v1054 = vpack.c.b16 %v806, %v802
    %v1055 = vpack.c.b16 %v807, %v803
    %v1056 = vpack.c.b16 %v812, %v808
    %v1057 = vpack.c.b16 %v813, %v809
    %v1058 = vpack.c.b16 %v814, %v810
    %v1059 = vpack.c.b16 %v815, %v811
    %v1060 = vpack.c.b16 %v820, %v816
    %v1061 = vpack.c.b16 %v821, %v817
    %v1062 = vpack.c.b16 %v822, %v818
    %v1063 = vpack.c.b16 %v823, %v819
    %v1064 = vpack.c.b16 %v828, %v824
    %v1065 = vpack.c.b16 %v829, %v825
    %v1066 = vpack.c.b16 %v830, %v826
    %v1067 = vpack.c.b16 %v831, %v827
    %v1068 = vpack.c.b16 %v836, %v832
    %v1069 = vpack.c.b16 %v837, %v833
    %v1070 = vpack.c.b16 %v838, %v834
    %v1071 = vpack.c.b16 %v839, %v835
    %v1072 = vpack.c.b16 %v844, %v840
    %v1073 = vpack.c.b16 %v845, %v841
    %v1074 = vpack.c.b16 %v846, %v842
    %v1075 = vpack.c.b16 %v847, %v843
    %v1076 = vpack.c.b16 %v852, %v848
    %v1077 = vpack.c.b16 %v853, %v849
    %v1078 = vpack.c.b16 %v854, %v850
    %v1079 = vpack.c.b16 %v855, %v851
    %v1080 = vpack.c.b16 %v860, %v856
    %v1081 = vpack.c.b16 %v861, %v857
    %v1082 = vpack.c.b16 %v862, %v858
    %v1083 = vpack.c.b16 %v863, %v859
    %v1084 = vpack.c.b16 %v868, %v864
    %v1085 = vpack.c.b16 %v869, %v865
    %v1086 = vpack.c.b16 %v870, %v866
    %v1087 = vpack.c.b16 %v871, %v867
    %v1088 = vpack.c.b16 %v876, %v872
    %v1089 = vpack.c.b16 %v877, %v873
    %v1090 = vpack.c.b16 %v878, %v874
    %v1091 = vpack.c.b16 %v879, %v875
    %v1092 = vpack.c.b16 %v884, %v880
    %v1093 = vpack.c.b16 %v885, %v881
    %v1094 = vpack.c.b16 %v886, %v882
    %v1095 = vpack.c.b16 %v887, %v883
    %v1096 = vpack.c.b16 %v892, %v888
    %v1097 = vpack.c.b16 %v893, %v889
    %v1098 = vpack.c.b16 %v894, %v890
    %v1099 = vpack.c.b16 %v895, %v891
    %v1100 = vpack.c.b16 %v900, %v896
    %v1101 = vpack.c.b16 %v901, %v897
    %v1102 = vpack.c.b16 %v902, %v898
    %v1103 = vpack.c.b16 %v903, %v899
    %v1104 = vpack.c.b16 %v908, %v904
    %v1105 = vpack.c.b16 %v909, %v905
    %v1106 = vpack.c.b16 %v910, %v906
    %v1107 = vpack.c.b16 %v911, %v907
    %v1108 = vpack.c.b16 %v916, %v912
    %v1109 = vpack.c.b16 %v917, %v913
    %v1110 = vpack.c.b16 %v918, %v914
    %v1111 = vpack.c.b16 %v919, %v915
    %1304 = vmatprep.subr.bf16.mxu0 %v949
    %1305 = vmatpush1.bf16.msra.mxu0 %v948
    %1306 = vmatprep.subr.bf16.mxu0 %v945
    %1307 = vmatpush1.bf16.msra.mxu0 %v944
    %1308 = vmatprep.subr.bf16.mxu0 %v941
    %1309 = vmatpush1.bf16.msra.mxu0 %v940
    %1310 = vmatprep.subr.bf16.mxu0 %v937
    %1311 = vmatpush1.bf16.msra.mxu0 %v936
    %1312 = vmatprep.subr.bf16.mxu0 %v933
    %1313 = vmatpush1.bf16.msra.mxu0 %v932
    %1314 = vmatprep.subr.bf16.mxu0 %v929
    %1315 = vmatpush1.bf16.msra.mxu0 %v928
    %1316 = vmatprep.subr.bf16.mxu0 %v925
    %1317 = vmatpush1.bf16.msra.mxu0 %v924
    %1318 = vmatprep.subr.bf16.mxu0 %v921
    %1319 = vmatpush1.bf16.msra.mxu0 %v920
    %1320 = vmatprep.subr.bf16.mxu0 %v981
    %1321 = vmatpush2.bf16.msra.mxu0 %v980
    %1322 = vmatprep.subr.bf16.mxu0 %v977
    %1323 = vmatpush2.bf16.msra.mxu0 %v976
    %1324 = vmatprep.subr.bf16.mxu0 %v973
    %1325 = vmatpush2.bf16.msra.mxu0 %v972
    %1326 = vmatprep.subr.bf16.mxu0 %v969
    %1327 = vmatpush2.bf16.msra.mxu0 %v968
    %1328 = vmatprep.subr.bf16.mxu0 %v965
    %1329 = vmatpush2.bf16.msra.mxu0 %v964
    %1330 = vmatprep.subr.bf16.mxu0 %v961
    %1331 = vmatpush2.bf16.msra.mxu0 %v960
    %1332 = vmatprep.subr.bf16.mxu0 %v957
    %1333 = vmatpush2.bf16.msra.mxu0 %v956
    %1334 = vmatprep.subr.bf16.mxu0 %v953
    %1335 = vmatpush2.bf16.msra.mxu0 %v952
    %1336 = vmatprep.mubr.bf16.mxu0 %v328
    %1337 = vmatmul.mubr.bf16.gmra.mxu0 %v314
    %v1338 = vpop.f32.mrf.mxu0
    %v1339 = vadd.f32 %v273, %v1338
    %v1340 = vpop.f32.mrf.mxu0
    %v1341 = vadd.f32 %v277, %v1340
    %v1342 = vpop.f32.mrf.mxu0
    %v1343 = vpop.f32.mrf.mxu0
    %1344 = vdwg.mxu0
    %1345 = vmatprep.subr.bf16.mxu0 %v1013
    %1346 = vmatpush1.bf16.msra.mxu0 %v1012
    %1347 = vmatprep.subr.bf16.mxu0 %v1009
    %1348 = vmatpush1.bf16.msra.mxu0 %v1008
    %1349 = vmatprep.subr.bf16.mxu0 %v1005
    %1350 = vmatpush1.bf16.msra.mxu0 %v1004
    %1351 = vmatprep.subr.bf16.mxu0 %v1001
    %1352 = vmatpush1.bf16.msra.mxu0 %v1000
    %1353 = vmatprep.subr.bf16.mxu0 %v997
    %1354 = vmatpush1.bf16.msra.mxu0 %v996
    %1355 = vmatprep.subr.bf16.mxu0 %v993
    %1356 = vmatpush1.bf16.msra.mxu0 %v992
    %1357 = vmatprep.subr.bf16.mxu0 %v989
    %1358 = vmatpush1.bf16.msra.mxu0 %v988
    %1359 = vmatprep.subr.bf16.mxu0 %v985
    %1360 = vmatpush1.bf16.msra.mxu0 %v984
    %1361 = vmatprep.subr.bf16.mxu0 %v1045
    %1362 = vmatpush2.bf16.msra.mxu0 %v1044
    %1363 = vmatprep.subr.bf16.mxu0 %v1041
    %1364 = vmatpush2.bf16.msra.mxu0 %v1040
    %1365 = vmatprep.subr.bf16.mxu0 %v1037
    %1366 = vmatpush2.bf16.msra.mxu0 %v1036
    %1367 = vmatprep.subr.bf16.mxu0 %v1033
    %1368 = vmatpush2.bf16.msra.mxu0 %v1032
    %1369 = vmatprep.subr.bf16.mxu0 %v1029
    %1370 = vmatpush2.bf16.msra.mxu0 %v1028
    %1371 = vmatprep.subr.bf16.mxu0 %v1025
    %1372 = vmatpush2.bf16.msra.mxu0 %v1024
    %1373 = vmatprep.subr.bf16.mxu0 %v1021
    %1374 = vmatpush2.bf16.msra.mxu0 %v1020
    %1375 = vmatprep.subr.bf16.mxu0 %v1017
    %1376 = vmatpush2.bf16.msra.mxu0 %v1016
    %1377 = vmatprep.mubr.bf16.mxu0 %v337
    %1378 = vmatmul.mubr.bf16.gmra.mxu0 %v336
    %v1379 = vpop.f32.mrf.mxu0
    %v1380 = vadd.f32 %v1339, %v1379
    %v1381 = vpop.f32.mrf.mxu0
    %v1382 = vadd.f32 %v1341, %v1381
    %v1383 = vpop.f32.mrf.mxu0
    %v1384 = vpop.f32.mrf.mxu0
    %1385 = vdwg.mxu0
    %1386 = vmatprep.subr.bf16.mxu0 %v1077
    %1387 = vmatpush1.bf16.msra.mxu0 %v1076
    %1388 = vmatprep.subr.bf16.mxu0 %v1073
    %1389 = vmatpush1.bf16.msra.mxu0 %v1072
    %1390 = vmatprep.subr.bf16.mxu0 %v1069
    %1391 = vmatpush1.bf16.msra.mxu0 %v1068
    %1392 = vmatprep.subr.bf16.mxu0 %v1065
    %1393 = vmatpush1.bf16.msra.mxu0 %v1064
    %1394 = vmatprep.subr.bf16.mxu0 %v1061
    %1395 = vmatpush1.bf16.msra.mxu0 %v1060
    %1396 = vmatprep.subr.bf16.mxu0 %v1057
    %1397 = vmatpush1.bf16.msra.mxu0 %v1056
    %1398 = vmatprep.subr.bf16.mxu0 %v1053
    %1399 = vmatpush1.bf16.msra.mxu0 %v1052
    %1400 = vmatprep.subr.bf16.mxu0 %v1049
    %1401 = vmatpush1.bf16.msra.mxu0 %v1048
    %1402 = vmatprep.subr.bf16.mxu0 %v1109
    %1403 = vmatpush2.bf16.msra.mxu0 %v1108
    %1404 = vmatprep.subr.bf16.mxu0 %v1105
    %1405 = vmatpush2.bf16.msra.mxu0 %v1104
    %1406 = vmatprep.subr.bf16.mxu0 %v1101
    %1407 = vmatpush2.bf16.msra.mxu0 %v1100
    %1408 = vmatprep.subr.bf16.mxu0 %v1097
    %1409 = vmatpush2.bf16.msra.mxu0 %v1096
    %1410 = vmatprep.subr.bf16.mxu0 %v1093
    %1411 = vmatpush2.bf16.msra.mxu0 %v1092
    %1412 = vmatprep.subr.bf16.mxu0 %v1089
    %1413 = vmatpush2.bf16.msra.mxu0 %v1088
    %1414 = vmatprep.subr.bf16.mxu0 %v1085
    %1415 = vmatpush2.bf16.msra.mxu0 %v1084
    %1416 = vmatprep.subr.bf16.mxu0 %v1081
    %1417 = vmatpush2.bf16.msra.mxu0 %v1080
    %1418 = vmatprep.mubr.bf16.mxu0 %v335
    %1419 = vmatmul.mubr.bf16.gmra.mxu0 %v321
    %v1420 = vpop.f32.mrf.mxu0
    %v1421 = vadd.f32 %v1380, %v1420
    %v1422 = vpop.f32.mrf.mxu0
    %v1423 = vadd.f32 %v1382, %v1422
    %v1424 = vpop.f32.mrf.mxu0
    %v1425 = vpop.f32.mrf.mxu0
    %1426 = vdwg.mxu0
    %1427 = vmatprep.subr.bf16.mxu0 %v951
    %1428 = vmatpush1.bf16.msra.mxu0 %v950
    %1429 = vmatprep.subr.bf16.mxu0 %v947
    %1430 = vmatpush1.bf16.msra.mxu0 %v946
    %1431 = vmatprep.subr.bf16.mxu0 %v943
    %1432 = vmatpush1.bf16.msra.mxu0 %v942
    %1433 = vmatprep.subr.bf16.mxu0 %v939
    %1434 = vmatpush1.bf16.msra.mxu0 %v938
    %1435 = vmatprep.subr.bf16.mxu0 %v935
    %1436 = vmatpush1.bf16.msra.mxu0 %v934
    %1437 = vmatprep.subr.bf16.mxu0 %v931
    %1438 = vmatpush1.bf16.msra.mxu0 %v930
    %1439 = vmatprep.subr.bf16.mxu0 %v927
    %1440 = vmatpush1.bf16.msra.mxu0 %v926
    %1441 = vmatprep.subr.bf16.mxu0 %v923
    %1442 = vmatpush1.bf16.msra.mxu0 %v922
    %1443 = vmatprep.subr.bf16.mxu0 %v983
    %1444 = vmatpush2.bf16.msra.mxu0 %v982
    %1445 = vmatprep.subr.bf16.mxu0 %v979
    %1446 = vmatpush2.bf16.msra.mxu0 %v978
    %1447 = vmatprep.subr.bf16.mxu0 %v975
    %1448 = vmatpush2.bf16.msra.mxu0 %v974
    %1449 = vmatprep.subr.bf16.mxu0 %v971
    %1450 = vmatpush2.bf16.msra.mxu0 %v970
    %1451 = vmatprep.subr.bf16.mxu0 %v967
    %1452 = vmatpush2.bf16.msra.mxu0 %v966
    %1453 = vmatprep.subr.bf16.mxu0 %v963
    %1454 = vmatpush2.bf16.msra.mxu0 %v962
    %1455 = vmatprep.subr.bf16.mxu0 %v959
    %1456 = vmatpush2.bf16.msra.mxu0 %v958
    %1457 = vmatprep.subr.bf16.mxu0 %v955
    %1458 = vmatpush2.bf16.msra.mxu0 %v954
    %1459 = vmatprep.mubr.bf16.mxu0 %v328
    %1460 = vmatmul.mubr.bf16.gmra.mxu0 %v314
    %v1461 = vpop.f32.mrf.mxu0
    %v1462 = vadd.f32 %v281, %v1461
    %v1463 = vpop.f32.mrf.mxu0
    %v1464 = vadd.f32 %v285, %v1463
    %v1465 = vpop.f32.mrf.mxu0
    %v1466 = vpop.f32.mrf.mxu0
    %1467 = vdwg.mxu0
    %1468 = vmatprep.subr.bf16.mxu0 %v1015
    %1469 = vmatpush1.bf16.msra.mxu0 %v1014
    %1470 = vmatprep.subr.bf16.mxu0 %v1011
    %1471 = vmatpush1.bf16.msra.mxu0 %v1010
    %1472 = vmatprep.subr.bf16.mxu0 %v1007
    %1473 = vmatpush1.bf16.msra.mxu0 %v1006
    %1474 = vmatprep.subr.bf16.mxu0 %v1003
    %1475 = vmatpush1.bf16.msra.mxu0 %v1002
    %1476 = vmatprep.subr.bf16.mxu0 %v999
    %1477 = vmatpush1.bf16.msra.mxu0 %v998
    %1478 = vmatprep.subr.bf16.mxu0 %v995
    %1479 = vmatpush1.bf16.msra.mxu0 %v994
    %1480 = vmatprep.subr.bf16.mxu0 %v991
    %1481 = vmatpush1.bf16.msra.mxu0 %v990
    %1482 = vmatprep.subr.bf16.mxu0 %v987
    %1483 = vmatpush1.bf16.msra.mxu0 %v986
    %1484 = vmatprep.subr.bf16.mxu0 %v1047
    %1485 = vmatpush2.bf16.msra.mxu0 %v1046
    %1486 = vmatprep.subr.bf16.mxu0 %v1043
    %1487 = vmatpush2.bf16.msra.mxu0 %v1042
    %1488 = vmatprep.subr.bf16.mxu0 %v1039
    %1489 = vmatpush2.bf16.msra.mxu0 %v1038
    %1490 = vmatprep.subr.bf16.mxu0 %v1035
    %1491 = vmatpush2.bf16.msra.mxu0 %v1034
    %1492 = vmatprep.subr.bf16.mxu0 %v1031
    %1493 = vmatpush2.bf16.msra.mxu0 %v1030
    %1494 = vmatprep.subr.bf16.mxu0 %v1027
    %1495 = vmatpush2.bf16.msra.mxu0 %v1026
    %1496 = vmatprep.subr.bf16.mxu0 %v1023
    %1497 = vmatpush2.bf16.msra.mxu0 %v1022
    %1498 = vmatprep.subr.bf16.mxu0 %v1019
    %1499 = vmatpush2.bf16.msra.mxu0 %v1018
    %1500 = vmatprep.mubr.bf16.mxu0 %v337
    %1501 = vmatmul.mubr.bf16.gmra.mxu0 %v336
    %v1502 = vpop.f32.mrf.mxu0
    %v1503 = vadd.f32 %v1462, %v1502
    %v1504 = vpop.f32.mrf.mxu0
    %v1505 = vadd.f32 %v1464, %v1504
    %v1506 = vpop.f32.mrf.mxu0
    %v1507 = vpop.f32.mrf.mxu0
    %1508 = vdwg.mxu0
    %1509 = vmatprep.subr.bf16.mxu0 %v1079
    %1510 = vmatpush1.bf16.msra.mxu0 %v1078
    %1511 = vmatprep.subr.bf16.mxu0 %v1075
    %1512 = vmatpush1.bf16.msra.mxu0 %v1074
    %1513 = vmatprep.subr.bf16.mxu0 %v1071
    %1514 = vmatpush1.bf16.msra.mxu0 %v1070
    %1515 = vmatprep.subr.bf16.mxu0 %v1067
    %1516 = vmatpush1.bf16.msra.mxu0 %v1066
    %1517 = vmatprep.subr.bf16.mxu0 %v1063
    %1518 = vmatpush1.bf16.msra.mxu0 %v1062
    %1519 = vmatprep.subr.bf16.mxu0 %v1059
    %1520 = vmatpush1.bf16.msra.mxu0 %v1058
    %1521 = vmatprep.subr.bf16.mxu0 %v1055
    %1522 = vmatpush1.bf16.msra.mxu0 %v1054
    %1523 = vmatprep.subr.bf16.mxu0 %v1051
    %1524 = vmatpush1.bf16.msra.mxu0 %v1050
    %1525 = vmatprep.subr.bf16.mxu0 %v1111
    %1526 = vmatpush2.bf16.msra.mxu0 %v1110
    %1527 = vmatprep.subr.bf16.mxu0 %v1107
    %1528 = vmatpush2.bf16.msra.mxu0 %v1106
    %1529 = vmatprep.subr.bf16.mxu0 %v1103
    %1530 = vmatpush2.bf16.msra.mxu0 %v1102
    %1531 = vmatprep.subr.bf16.mxu0 %v1099
    %1532 = vmatpush2.bf16.msra.mxu0 %v1098
    %1533 = vmatprep.subr.bf16.mxu0 %v1095
    %1534 = vmatpush2.bf16.msra.mxu0 %v1094
    %1535 = vmatprep.subr.bf16.mxu0 %v1091
    %1536 = vmatpush2.bf16.msra.mxu0 %v1090
    %1537 = vmatprep.subr.bf16.mxu0 %v1087
    %1538 = vmatpush2.bf16.msra.mxu0 %v1086
    %1539 = vmatprep.subr.bf16.mxu0 %v1083
    %1540 = vmatpush2.bf16.msra.mxu0 %v1082
    %1541 = vmatprep.mubr.bf16.mxu0 %v335
    %1542 = vmatmul.mubr.bf16.gmra.mxu0 %v321
    %v1543 = vpop.f32.mrf.mxu0
    %v1544 = vadd.f32 %v1503, %v1543
    %v1545 = vpop.f32.mrf.mxu0
    %v1546 = vadd.f32 %v1505, %v1545
    %v1547 = vpop.f32.mrf.mxu0
    %v1548 = vpop.f32.mrf.mxu0
    %1549 = vdwg.mxu0
    %v1550 = vmax.f32 %v1421, 0.0
    %v1551 = vmax.f32 %v1423, 0.0
    %v1552 = vmax.f32 %v1544, 0.0
    %v1553 = vmax.f32 %v1546, 0.0
    %v1554 = vld [vmem:[#allocation5] sm:$0xf]
    %v1555 = vunpack.c.l.bf16 %v1554
    %v1557 = vcombine.high %v1555, %v1555
    %v1559 = vunpack.c.l.s4 1983009808
    %v1560 = vunpack.c.0.s8 %v1559
    %v1561 = vlaneseq
    %v1562 = vshrl.u32 %v1561, 7
    %v1563 = vsub.s32 %v1560, %v1562
    %v1564 = vrot.slane %v1555, %v1563
    %v1566 = vunpack.c.l.s4 1983009808
    %v1567 = vunpack.c.0.s8 %v1566
    %v1568 = vlaneseq
    %v1569 = vshrl.u32 %v1568, 7
    %v1570 = vsub.s32 %v1567, %v1569
    %v1571 = vrot.slane %v1557, %v1570
    %v1572 = vcombine.high %v1564, %v1564
    %v1573 = vcombine.high %v1571, %v1571
    %v1578 = vmul.f32 %v1550, %v1564
    %v1579 = vmul.f32 %v1551, %v1572
    %v1580 = vmul.f32 %v1552, %v1571
    %v1581 = vmul.f32 %v1553, %v1573
    %v1582 = vpack.c.bf16 %v1578, %v1578
    %v1583 = vpack.c.bf16 %v1579, %v1579
    %v1584 = vpack.c.bf16 %v1580, %v1580
    %v1585 = vpack.c.bf16 %v1581, %v1581
    %v1586 = vld [vmem:[#allocation8] sm:$0xff]
    %v1587 = vld [vmem:[#allocation8 + $0x8] sm:$0xff]
    %v1588 = vld [vmem:[#allocation8 + $0x10] sm:$0xff]
    %v1589 = vld [vmem:[#allocation8 + $0x18] sm:$0xff]
    %v1590 = vld [vmem:[#allocation8 + $0x20] sm:$0xff]
    %v1591 = vld [vmem:[#allocation8 + $0x28] sm:$0xff]
    %v1592 = vld [vmem:[#allocation8 + $0x30] sm:$0xff]
    %v1593 = vld [vmem:[#allocation8 + $0x38] sm:$0xff]
    %v1594 = vld [vmem:[#allocation8 + $0x40] sm:$0xff]
    %v1595 = vld [vmem:[#allocation8 + $0x48] sm:$0xff]
    %v1596 = vld [vmem:[#allocation8 + $0x50] sm:$0xff]
    %v1597 = vld [vmem:[#allocation8 + $0x58] sm:$0xff]
    %v1598 = vld [vmem:[#allocation8 + $0x60] sm:$0xff]
    %v1599 = vld [vmem:[#allocation8 + $0x68] sm:$0xff]
    %v1600 = vld [vmem:[#allocation8 + $0x70] sm:$0xff]
    %v1601 = vld [vmem:[#allocation8 + $0x78] sm:$0xff]
    %v1602 = vld [vmem:[#allocation8 + $0x80] sm:$0xff]
    %v1603 = vld [vmem:[#allocation8 + $0x88] sm:$0xff]
    %v1604 = vld [vmem:[#allocation8 + $0x90] sm:$0xff]
    %v1605 = vld [vmem:[#allocation8 + $0x98] sm:$0xff]
    %v1606 = vld [vmem:[#allocation8 + $0xa0] sm:$0xff]
    %v1607 = vld [vmem:[#allocation8 + $0xa8] sm:$0xff]
    %v1608 = vld [vmem:[#allocation8 + $0xb0] sm:$0xff]
    %v1609 = vld [vmem:[#allocation8 + $0xb8] sm:$0xff]
    %v1610 = vld [vmem:[#allocation8 + $0xc0] sm:$0xff]
    %v1611 = vld [vmem:[#allocation8 + $0xc8] sm:$0xff]
    %v1612 = vld [vmem:[#allocation8 + $0xd0] sm:$0xff]
    %v1613 = vld [vmem:[#allocation8 + $0xd8] sm:$0xff]
    %v1614 = vld [vmem:[#allocation8 + $0xe0] sm:$0xff]
    %v1615 = vld [vmem:[#allocation8 + $0xe8] sm:$0xff]
    %v1616 = vld [vmem:[#allocation8 + $0xf0] sm:$0xff]
    %v1617 = vld [vmem:[#allocation8 + $0xf8] sm:$0xff]
    %v1618 = vld [vmem:[#allocation8 + $0x100] sm:$0xff]
    %v1619 = vld [vmem:[#allocation8 + $0x108] sm:$0xff]
    %v1620 = vld [vmem:[#allocation8 + $0x110] sm:$0xff]
    %v1621 = vld [vmem:[#allocation8 + $0x118] sm:$0xff]
    %v1622 = vld [vmem:[#allocation8 + $0x120] sm:$0xff]
    %v1623 = vld [vmem:[#allocation8 + $0x128] sm:$0xff]
    %v1624 = vld [vmem:[#allocation8 + $0x130] sm:$0xff]
    %v1625 = vld [vmem:[#allocation8 + $0x138] sm:$0xff]
    %v1626 = vld [vmem:[#allocation8 + $0x140] sm:$0xff]
    %v1627 = vld [vmem:[#allocation8 + $0x148] sm:$0xff]
    %v1628 = vld [vmem:[#allocation8 + $0x150] sm:$0xff]
    %v1629 = vld [vmem:[#allocation8 + $0x158] sm:$0xff]
    %v1630 = vld [vmem:[#allocation8 + $0x160] sm:$0xff]
    %v1631 = vld [vmem:[#allocation8 + $0x168] sm:$0xff]
    %v1632 = vld [vmem:[#allocation8 + $0x170] sm:$0xff]
    %v1633 = vld [vmem:[#allocation8 + $0x178] sm:$0xff]
    %v1634 = vld [vmem:[#allocation8 + $0x180] sm:$0xff]
    %v1635 = vld [vmem:[#allocation8 + $0x188] sm:$0xff]
    %v1636 = vld [vmem:[#allocation8 + $0x190] sm:$0xff]
    %v1637 = vld [vmem:[#allocation8 + $0x198] sm:$0xff]
    %v1638 = vld [vmem:[#allocation8 + $0x1a0] sm:$0xff]
    %v1639 = vld [vmem:[#allocation8 + $0x1a8] sm:$0xff]
    %v1640 = vld [vmem:[#allocation8 + $0x1b0] sm:$0xff]
    %v1641 = vld [vmem:[#allocation8 + $0x1b8] sm:$0xff]
    %v1642 = vld [vmem:[#allocation8 + $0x1c0] sm:$0xff]
    %v1643 = vld [vmem:[#allocation8 + $0x1c8] sm:$0xff]
    %v1644 = vld [vmem:[#allocation8 + $0x1d0] sm:$0xff]
    %v1645 = vld [vmem:[#allocation8 + $0x1d8] sm:$0xff]
    %v1646 = vld [vmem:[#allocation8 + $0x1e0] sm:$0xff]
    %v1647 = vld [vmem:[#allocation8 + $0x1e8] sm:$0xff]
    %v1648 = vld [vmem:[#allocation8 + $0x1f0] sm:$0xff]
    %v1649 = vld [vmem:[#allocation8 + $0x1f8] sm:$0xff]
    %v1650 = vld [vmem:[#allocation8 + $0x200] sm:$0xff]
    %v1651 = vld [vmem:[#allocation8 + $0x208] sm:$0xff]
    %v1652 = vld [vmem:[#allocation8 + $0x210] sm:$0xff]
    %v1653 = vld [vmem:[#allocation8 + $0x218] sm:$0xff]
    %v1654 = vld [vmem:[#allocation8 + $0x220] sm:$0xff]
    %v1655 = vld [vmem:[#allocation8 + $0x228] sm:$0xff]
    %v1656 = vld [vmem:[#allocation8 + $0x230] sm:$0xff]
    %v1657 = vld [vmem:[#allocation8 + $0x238] sm:$0xff]
    %v1658 = vld [vmem:[#allocation8 + $0x240] sm:$0xff]
    %v1659 = vld [vmem:[#allocation8 + $0x248] sm:$0xff]
    %v1660 = vld [vmem:[#allocation8 + $0x250] sm:$0xff]
    %v1661 = vld [vmem:[#allocation8 + $0x258] sm:$0xff]
    %v1662 = vld [vmem:[#allocation8 + $0x260] sm:$0xff]
    %v1663 = vld [vmem:[#allocation8 + $0x268] sm:$0xff]
    %v1664 = vld [vmem:[#allocation8 + $0x270] sm:$0xff]
    %v1665 = vld [vmem:[#allocation8 + $0x278] sm:$0xff]
    %v1666 = vld [vmem:[#allocation8 + $0x280] sm:$0xff]
    %v1667 = vld [vmem:[#allocation8 + $0x288] sm:$0xff]
    %v1668 = vld [vmem:[#allocation8 + $0x290] sm:$0xff]
    %v1669 = vld [vmem:[#allocation8 + $0x298] sm:$0xff]
    %v1670 = vld [vmem:[#allocation8 + $0x2a0] sm:$0xff]
    %v1671 = vld [vmem:[#allocation8 + $0x2a8] sm:$0xff]
    %v1672 = vld [vmem:[#allocation8 + $0x2b0] sm:$0xff]
    %v1673 = vld [vmem:[#allocation8 + $0x2b8] sm:$0xff]
    %v1674 = vld [vmem:[#allocation8 + $0x2c0] sm:$0xff]
    %v1675 = vld [vmem:[#allocation8 + $0x2c8] sm:$0xff]
    %v1676 = vld [vmem:[#allocation8 + $0x2d0] sm:$0xff]
    %v1677 = vld [vmem:[#allocation8 + $0x2d8] sm:$0xff]
    %v1678 = vld [vmem:[#allocation8 + $0x2e0] sm:$0xff]
    %v1679 = vld [vmem:[#allocation8 + $0x2e8] sm:$0xff]
    %v1680 = vld [vmem:[#allocation8 + $0x2f0] sm:$0xff]
    %v1681 = vld [vmem:[#allocation8 + $0x2f8] sm:$0xff]
    %v1682 = vld [vmem:[#allocation8 + $0x300] sm:$0xff]
    %v1683 = vld [vmem:[#allocation8 + $0x308] sm:$0xff]
    %v1684 = vld [vmem:[#allocation8 + $0x310] sm:$0xff]
    %v1685 = vld [vmem:[#allocation8 + $0x318] sm:$0xff]
    %v1686 = vld [vmem:[#allocation8 + $0x320] sm:$0xff]
    %v1687 = vld [vmem:[#allocation8 + $0x328] sm:$0xff]
    %v1688 = vld [vmem:[#allocation8 + $0x330] sm:$0xff]
    %v1689 = vld [vmem:[#allocation8 + $0x338] sm:$0xff]
    %v1690 = vld [vmem:[#allocation8 + $0x340] sm:$0xff]
    %v1691 = vld [vmem:[#allocation8 + $0x348] sm:$0xff]
    %v1692 = vld [vmem:[#allocation8 + $0x350] sm:$0xff]
    %v1693 = vld [vmem:[#allocation8 + $0x358] sm:$0xff]
    %v1694 = vld [vmem:[#allocation8 + $0x360] sm:$0xff]
    %v1695 = vld [vmem:[#allocation8 + $0x368] sm:$0xff]
    %v1696 = vld [vmem:[#allocation8 + $0x370] sm:$0xff]
    %v1697 = vld [vmem:[#allocation8 + $0x378] sm:$0xff]
    %v1698 = vld [vmem:[#allocation8 + $0x380] sm:$0xff]
    %v1699 = vld [vmem:[#allocation8 + $0x388] sm:$0xff]
    %v1700 = vld [vmem:[#allocation8 + $0x390] sm:$0xff]
    %v1701 = vld [vmem:[#allocation8 + $0x398] sm:$0xff]
    %v1702 = vld [vmem:[#allocation8 + $0x3a0] sm:$0xff]
    %v1703 = vld [vmem:[#allocation8 + $0x3a8] sm:$0xff]
    %v1704 = vld [vmem:[#allocation8 + $0x3b0] sm:$0xff]
    %v1705 = vld [vmem:[#allocation8 + $0x3b8] sm:$0xff]
    %v1706 = vld [vmem:[#allocation8 + $0x3c0] sm:$0xff]
    %v1707 = vld [vmem:[#allocation8 + $0x3c8] sm:$0xff]
    %v1708 = vld [vmem:[#allocation8 + $0x3d0] sm:$0xff]
    %v1709 = vld [vmem:[#allocation8 + $0x3d8] sm:$0xff]
    %v1710 = vld [vmem:[#allocation8 + $0x3e0] sm:$0xff]
    %v1711 = vld [vmem:[#allocation8 + $0x3e8] sm:$0xff]
    %v1712 = vld [vmem:[#allocation8 + $0x3f0] sm:$0xff]
    %v1713 = vld [vmem:[#allocation8 + $0x3f8] sm:$0xff]
    %v1714 = vld [vmem:[%s5] sm:$0xf]
    %v1716 = vlaneseq
    %v1717 = vshrl.u32 %v1716, 7
    %v1718 = vsub.s32 0, %v1717
    %v1719 = vrot.slane %v1714, %v1718
    %v1720 = vlaneseq
    %v1721 = vshrl.u32 %v1720, 7
    %v1722 = vsub.s32 1, %v1721
    %v1723 = vrot.slane %v1714, %v1722
    %v1724 = vlaneseq
    %v1725 = vshrl.u32 %v1724, 7
    %v1726 = vsub.s32 2, %v1725
    %v1727 = vrot.slane %v1714, %v1726
    %v1728 = vlaneseq
    %v1729 = vshrl.u32 %v1728, 7
    %v1730 = vsub.s32 3, %v1729
    %v1731 = vrot.slane %v1714, %v1730
    %v1864 = vunpack.c.l.b16 %v1586
    %v1865 = vunpack.c.h.b16 %v1586
    %v1866 = vunpack.c.l.b16 %v1587
    %v1867 = vunpack.c.h.b16 %v1587
    %v1868 = vunpack.c.l.b16 %v1588
    %v1869 = vunpack.c.h.b16 %v1588
    %v1870 = vunpack.c.l.b16 %v1589
    %v1871 = vunpack.c.h.b16 %v1589
    %v1872 = vunpack.c.l.b16 %v1590
    %v1873 = vunpack.c.h.b16 %v1590
    %v1874 = vunpack.c.l.b16 %v1591
    %v1875 = vunpack.c.h.b16 %v1591
    %v1876 = vunpack.c.l.b16 %v1592
    %v1877 = vunpack.c.h.b16 %v1592
    %v1878 = vunpack.c.l.b16 %v1593
    %v1879 = vunpack.c.h.b16 %v1593
    %v1880 = vunpack.c.l.b16 %v1594
    %v1881 = vunpack.c.h.b16 %v1594
    %v1882 = vunpack.c.l.b16 %v1595
    %v1883 = vunpack.c.h.b16 %v1595
    %v1884 = vunpack.c.l.b16 %v1596
    %v1885 = vunpack.c.h.b16 %v1596
    %v1886 = vunpack.c.l.b16 %v1597
    %v1887 = vunpack.c.h.b16 %v1597
    %v1888 = vunpack.c.l.b16 %v1598
    %v1889 = vunpack.c.h.b16 %v1598
    %v1890 = vunpack.c.l.b16 %v1599
    %v1891 = vunpack.c.h.b16 %v1599
    %v1892 = vunpack.c.l.b16 %v1600
    %v1893 = vunpack.c.h.b16 %v1600
    %v1894 = vunpack.c.l.b16 %v1601
    %v1895 = vunpack.c.h.b16 %v1601
    %v1896 = vunpack.c.l.b16 %v1602
    %v1897 = vunpack.c.h.b16 %v1602
    %v1898 = vunpack.c.l.b16 %v1603
    %v1899 = vunpack.c.h.b16 %v1603
    %v1900 = vunpack.c.l.b16 %v1604
    %v1901 = vunpack.c.h.b16 %v1604
    %v1902 = vunpack.c.l.b16 %v1605
    %v1903 = vunpack.c.h.b16 %v1605
    %v1904 = vunpack.c.l.b16 %v1606
    %v1905 = vunpack.c.h.b16 %v1606
    %v1906 = vunpack.c.l.b16 %v1607
    %v1907 = vunpack.c.h.b16 %v1607
    %v1908 = vunpack.c.l.b16 %v1608
    %v1909 = vunpack.c.h.b16 %v1608
    %v1910 = vunpack.c.l.b16 %v1609
    %v1911 = vunpack.c.h.b16 %v1609
    %v1912 = vunpack.c.l.b16 %v1610
    %v1913 = vunpack.c.h.b16 %v1610
    %v1914 = vunpack.c.l.b16 %v1611
    %v1915 = vunpack.c.h.b16 %v1611
    %v1916 = vunpack.c.l.b16 %v1612
    %v1917 = vunpack.c.h.b16 %v1612
    %v1918 = vunpack.c.l.b16 %v1613
    %v1919 = vunpack.c.h.b16 %v1613
    %v1920 = vunpack.c.l.b16 %v1614
    %v1921 = vunpack.c.h.b16 %v1614
    %v1922 = vunpack.c.l.b16 %v1615
    %v1923 = vunpack.c.h.b16 %v1615
    %v1924 = vunpack.c.l.b16 %v1616
    %v1925 = vunpack.c.h.b16 %v1616
    %v1926 = vunpack.c.l.b16 %v1617
    %v1927 = vunpack.c.h.b16 %v1617
    %v1928 = vunpack.c.l.b16 %v1618
    %v1929 = vunpack.c.h.b16 %v1618
    %v1930 = vunpack.c.l.b16 %v1619
    %v1931 = vunpack.c.h.b16 %v1619
    %v1932 = vunpack.c.l.b16 %v1620
    %v1933 = vunpack.c.h.b16 %v1620
    %v1934 = vunpack.c.l.b16 %v1621
    %v1935 = vunpack.c.h.b16 %v1621
    %v1936 = vunpack.c.l.b16 %v1622
    %v1937 = vunpack.c.h.b16 %v1622
    %v1938 = vunpack.c.l.b16 %v1623
    %v1939 = vunpack.c.h.b16 %v1623
    %v1940 = vunpack.c.l.b16 %v1624
    %v1941 = vunpack.c.h.b16 %v1624
    %v1942 = vunpack.c.l.b16 %v1625
    %v1943 = vunpack.c.h.b16 %v1625
    %v1944 = vunpack.c.l.b16 %v1626
    %v1945 = vunpack.c.h.b16 %v1626
    %v1946 = vunpack.c.l.b16 %v1627
    %v1947 = vunpack.c.h.b16 %v1627
    %v1948 = vunpack.c.l.b16 %v1628
    %v1949 = vunpack.c.h.b16 %v1628
    %v1950 = vunpack.c.l.b16 %v1629
    %v1951 = vunpack.c.h.b16 %v1629
    %v1952 = vunpack.c.l.b16 %v1630
    %v1953 = vunpack.c.h.b16 %v1630
    %v1954 = vunpack.c.l.b16 %v1631
    %v1955 = vunpack.c.h.b16 %v1631
    %v1956 = vunpack.c.l.b16 %v1632
    %v1957 = vunpack.c.h.b16 %v1632
    %v1958 = vunpack.c.l.b16 %v1633
    %v1959 = vunpack.c.h.b16 %v1633
    %v1960 = vunpack.c.l.b16 %v1634
    %v1961 = vunpack.c.h.b16 %v1634
    %v1962 = vunpack.c.l.b16 %v1635
    %v1963 = vunpack.c.h.b16 %v1635
    %v1964 = vunpack.c.l.b16 %v1636
    %v1965 = vunpack.c.h.b16 %v1636
    %v1966 = vunpack.c.l.b16 %v1637
    %v1967 = vunpack.c.h.b16 %v1637
    %v1968 = vunpack.c.l.b16 %v1638
    %v1969 = vunpack.c.h.b16 %v1638
    %v1970 = vunpack.c.l.b16 %v1639
    %v1971 = vunpack.c.h.b16 %v1639
    %v1972 = vunpack.c.l.b16 %v1640
    %v1973 = vunpack.c.h.b16 %v1640
    %v1974 = vunpack.c.l.b16 %v1641
    %v1975 = vunpack.c.h.b16 %v1641
    %v1976 = vunpack.c.l.b16 %v1642
    %v1977 = vunpack.c.h.b16 %v1642
    %v1978 = vunpack.c.l.b16 %v1643
    %v1979 = vunpack.c.h.b16 %v1643
    %v1980 = vunpack.c.l.b16 %v1644
    %v1981 = vunpack.c.h.b16 %v1644
    %v1982 = vunpack.c.l.b16 %v1645
    %v1983 = vunpack.c.h.b16 %v1645
    %v1984 = vunpack.c.l.b16 %v1646
    %v1985 = vunpack.c.h.b16 %v1646
    %v1986 = vunpack.c.l.b16 %v1647
    %v1987 = vunpack.c.h.b16 %v1647
    %v1988 = vunpack.c.l.b16 %v1648
    %v1989 = vunpack.c.h.b16 %v1648
    %v1990 = vunpack.c.l.b16 %v1649
    %v1991 = vunpack.c.h.b16 %v1649
    %v1992 = vunpack.c.l.b16 %v1650
    %v1993 = vunpack.c.h.b16 %v1650
    %v1994 = vunpack.c.l.b16 %v1651
    %v1995 = vunpack.c.h.b16 %v1651
    %v1996 = vunpack.c.l.b16 %v1652
    %v1997 = vunpack.c.h.b16 %v1652
    %v1998 = vunpack.c.l.b16 %v1653
    %v1999 = vunpack.c.h.b16 %v1653
    %v2000 = vunpack.c.l.b16 %v1654
    %v2001 = vunpack.c.h.b16 %v1654
    %v2002 = vunpack.c.l.b16 %v1655
    %v2003 = vunpack.c.h.b16 %v1655
    %v2004 = vunpack.c.l.b16 %v1656
    %v2005 = vunpack.c.h.b16 %v1656
    %v2006 = vunpack.c.l.b16 %v1657
    %v2007 = vunpack.c.h.b16 %v1657
    %v2008 = vunpack.c.l.b16 %v1658
    %v2009 = vunpack.c.h.b16 %v1658
    %v2010 = vunpack.c.l.b16 %v1659
    %v2011 = vunpack.c.h.b16 %v1659
    %v2012 = vunpack.c.l.b16 %v1660
    %v2013 = vunpack.c.h.b16 %v1660
    %v2014 = vunpack.c.l.b16 %v1661
    %v2015 = vunpack.c.h.b16 %v1661
    %v2016 = vunpack.c.l.b16 %v1662
    %v2017 = vunpack.c.h.b16 %v1662
    %v2018 = vunpack.c.l.b16 %v1663
    %v2019 = vunpack.c.h.b16 %v1663
    %v2020 = vunpack.c.l.b16 %v1664
    %v2021 = vunpack.c.h.b16 %v1664
    %v2022 = vunpack.c.l.b16 %v1665
    %v2023 = vunpack.c.h.b16 %v1665
    %v2024 = vunpack.c.l.b16 %v1666
    %v2025 = vunpack.c.h.b16 %v1666
    %v2026 = vunpack.c.l.b16 %v1667
    %v2027 = vunpack.c.h.b16 %v1667
    %v2028 = vunpack.c.l.b16 %v1668
    %v2029 = vunpack.c.h.b16 %v1668
    %v2030 = vunpack.c.l.b16 %v1669
    %v2031 = vunpack.c.h.b16 %v1669
    %v2032 = vunpack.c.l.b16 %v1670
    %v2033 = vunpack.c.h.b16 %v1670
    %v2034 = vunpack.c.l.b16 %v1671
    %v2035 = vunpack.c.h.b16 %v1671
    %v2036 = vunpack.c.l.b16 %v1672
    %v2037 = vunpack.c.h.b16 %v1672
    %v2038 = vunpack.c.l.b16 %v1673
    %v2039 = vunpack.c.h.b16 %v1673
    %v2040 = vunpack.c.l.b16 %v1674
    %v2041 = vunpack.c.h.b16 %v1674
    %v2042 = vunpack.c.l.b16 %v1675
    %v2043 = vunpack.c.h.b16 %v1675
    %v2044 = vunpack.c.l.b16 %v1676
    %v2045 = vunpack.c.h.b16 %v1676
    %v2046 = vunpack.c.l.b16 %v1677
    %v2047 = vunpack.c.h.b16 %v1677
    %v2048 = vunpack.c.l.b16 %v1678
    %v2049 = vunpack.c.h.b16 %v1678
    %v2050 = vunpack.c.l.b16 %v1679
    %v2051 = vunpack.c.h.b16 %v1679
    %v2052 = vunpack.c.l.b16 %v1680
    %v2053 = vunpack.c.h.b16 %v1680
    %v2054 = vunpack.c.l.b16 %v1681
    %v2055 = vunpack.c.h.b16 %v1681
    %v2056 = vunpack.c.l.b16 %v1682
    %v2057 = vunpack.c.h.b16 %v1682
    %v2058 = vunpack.c.l.b16 %v1683
    %v2059 = vunpack.c.h.b16 %v1683
    %v2060 = vunpack.c.l.b16 %v1684
    %v2061 = vunpack.c.h.b16 %v1684
    %v2062 = vunpack.c.l.b16 %v1685
    %v2063 = vunpack.c.h.b16 %v1685
    %v2064 = vunpack.c.l.b16 %v1686
    %v2065 = vunpack.c.h.b16 %v1686
    %v2066 = vunpack.c.l.b16 %v1687
    %v2067 = vunpack.c.h.b16 %v1687
    %v2068 = vunpack.c.l.b16 %v1688
    %v2069 = vunpack.c.h.b16 %v1688
    %v2070 = vunpack.c.l.b16 %v1689
    %v2071 = vunpack.c.h.b16 %v1689
    %v2072 = vunpack.c.l.b16 %v1690
    %v2073 = vunpack.c.h.b16 %v1690
    %v2074 = vunpack.c.l.b16 %v1691
    %v2075 = vunpack.c.h.b16 %v1691
    %v2076 = vunpack.c.l.b16 %v1692
    %v2077 = vunpack.c.h.b16 %v1692
    %v2078 = vunpack.c.l.b16 %v1693
    %v2079 = vunpack.c.h.b16 %v1693
    %v2080 = vunpack.c.l.b16 %v1694
    %v2081 = vunpack.c.h.b16 %v1694
    %v2082 = vunpack.c.l.b16 %v1695
    %v2083 = vunpack.c.h.b16 %v1695
    %v2084 = vunpack.c.l.b16 %v1696
    %v2085 = vunpack.c.h.b16 %v1696
    %v2086 = vunpack.c.l.b16 %v1697
    %v2087 = vunpack.c.h.b16 %v1697
    %v2088 = vunpack.c.l.b16 %v1698
    %v2089 = vunpack.c.h.b16 %v1698
    %v2090 = vunpack.c.l.b16 %v1699
    %v2091 = vunpack.c.h.b16 %v1699
    %v2092 = vunpack.c.l.b16 %v1700
    %v2093 = vunpack.c.h.b16 %v1700
    %v2094 = vunpack.c.l.b16 %v1701
    %v2095 = vunpack.c.h.b16 %v1701
    %v2096 = vunpack.c.l.b16 %v1702
    %v2097 = vunpack.c.h.b16 %v1702
    %v2098 = vunpack.c.l.b16 %v1703
    %v2099 = vunpack.c.h.b16 %v1703
    %v2100 = vunpack.c.l.b16 %v1704
    %v2101 = vunpack.c.h.b16 %v1704
    %v2102 = vunpack.c.l.b16 %v1705
    %v2103 = vunpack.c.h.b16 %v1705
    %v2104 = vunpack.c.l.b16 %v1706
    %v2105 = vunpack.c.h.b16 %v1706
    %v2106 = vunpack.c.l.b16 %v1707
    %v2107 = vunpack.c.h.b16 %v1707
    %v2108 = vunpack.c.l.b16 %v1708
    %v2109 = vunpack.c.h.b16 %v1708
    %v2110 = vunpack.c.l.b16 %v1709
    %v2111 = vunpack.c.h.b16 %v1709
    %v2112 = vunpack.c.l.b16 %v1710
    %v2113 = vunpack.c.h.b16 %v1710
    %v2114 = vunpack.c.l.b16 %v1711
    %v2115 = vunpack.c.h.b16 %v1711
    %v2116 = vunpack.c.l.b16 %v1712
    %v2117 = vunpack.c.h.b16 %v1712
    %v2118 = vunpack.c.l.b16 %v1713
    %v2119 = vunpack.c.h.b16 %v1713
    %v2120 = vpack.c.b16 %v1868, %v1864
    %v2121 = vpack.c.b16 %v1869, %v1865
    %v2122 = vpack.c.b16 %v1870, %v1866
    %v2123 = vpack.c.b16 %v1871, %v1867
    %v2124 = vpack.c.b16 %v1876, %v1872
    %v2125 = vpack.c.b16 %v1877, %v1873
    %v2126 = vpack.c.b16 %v1878, %v1874
    %v2127 = vpack.c.b16 %v1879, %v1875
    %v2128 = vpack.c.b16 %v1884, %v1880
    %v2129 = vpack.c.b16 %v1885, %v1881
    %v2130 = vpack.c.b16 %v1886, %v1882
    %v2131 = vpack.c.b16 %v1887, %v1883
    %v2132 = vpack.c.b16 %v1892, %v1888
    %v2133 = vpack.c.b16 %v1893, %v1889
    %v2134 = vpack.c.b16 %v1894, %v1890
    %v2135 = vpack.c.b16 %v1895, %v1891
    %v2136 = vpack.c.b16 %v1900, %v1896
    %v2137 = vpack.c.b16 %v1901, %v1897
    %v2138 = vpack.c.b16 %v1902, %v1898
    %v2139 = vpack.c.b16 %v1903, %v1899
    %v2140 = vpack.c.b16 %v1908, %v1904
    %v2141 = vpack.c.b16 %v1909, %v1905
    %v2142 = vpack.c.b16 %v1910, %v1906
    %v2143 = vpack.c.b16 %v1911, %v1907
    %v2144 = vpack.c.b16 %v1916, %v1912
    %v2145 = vpack.c.b16 %v1917, %v1913
    %v2146 = vpack.c.b16 %v1918, %v1914
    %v2147 = vpack.c.b16 %v1919, %v1915
    %v2148 = vpack.c.b16 %v1924, %v1920
    %v2149 = vpack.c.b16 %v1925, %v1921
    %v2150 = vpack.c.b16 %v1926, %v1922
    %v2151 = vpack.c.b16 %v1927, %v1923
    %v2152 = vpack.c.b16 %v1932, %v1928
    %v2153 = vpack.c.b16 %v1933, %v1929
    %v2154 = vpack.c.b16 %v1934, %v1930
    %v2155 = vpack.c.b16 %v1935, %v1931
    %v2156 = vpack.c.b16 %v1940, %v1936
    %v2157 = vpack.c.b16 %v1941, %v1937
    %v2158 = vpack.c.b16 %v1942, %v1938
    %v2159 = vpack.c.b16 %v1943, %v1939
    %v2160 = vpack.c.b16 %v1948, %v1944
    %v2161 = vpack.c.b16 %v1949, %v1945
    %v2162 = vpack.c.b16 %v1950, %v1946
    %v2163 = vpack.c.b16 %v1951, %v1947
    %v2164 = vpack.c.b16 %v1956, %v1952
    %v2165 = vpack.c.b16 %v1957, %v1953
    %v2166 = vpack.c.b16 %v1958, %v1954
    %v2167 = vpack.c.b16 %v1959, %v1955
    %v2168 = vpack.c.b16 %v1964, %v1960
    %v2169 = vpack.c.b16 %v1965, %v1961
    %v2170 = vpack.c.b16 %v1966, %v1962
    %v2171 = vpack.c.b16 %v1967, %v1963
    %v2172 = vpack.c.b16 %v1972, %v1968
    %v2173 = vpack.c.b16 %v1973, %v1969
    %v2174 = vpack.c.b16 %v1974, %v1970
    %v2175 = vpack.c.b16 %v1975, %v1971
    %v2176 = vpack.c.b16 %v1980, %v1976
    %v2177 = vpack.c.b16 %v1981, %v1977
    %v2178 = vpack.c.b16 %v1982, %v1978
    %v2179 = vpack.c.b16 %v1983, %v1979
    %v2180 = vpack.c.b16 %v1988, %v1984
    %v2181 = vpack.c.b16 %v1989, %v1985
    %v2182 = vpack.c.b16 %v1990, %v1986
    %v2183 = vpack.c.b16 %v1991, %v1987
    %v2184 = vpack.c.b16 %v1996, %v1992
    %v2185 = vpack.c.b16 %v1997, %v1993
    %v2186 = vpack.c.b16 %v1998, %v1994
    %v2187 = vpack.c.b16 %v1999, %v1995
    %v2188 = vpack.c.b16 %v2004, %v2000
    %v2189 = vpack.c.b16 %v2005, %v2001
    %v2190 = vpack.c.b16 %v2006, %v2002
    %v2191 = vpack.c.b16 %v2007, %v2003
    %v2192 = vpack.c.b16 %v2012, %v2008
    %v2193 = vpack.c.b16 %v2013, %v2009
    %v2194 = vpack.c.b16 %v2014, %v2010
    %v2195 = vpack.c.b16 %v2015, %v2011
    %v2196 = vpack.c.b16 %v2020, %v2016
    %v2197 = vpack.c.b16 %v2021, %v2017
    %v2198 = vpack.c.b16 %v2022, %v2018
    %v2199 = vpack.c.b16 %v2023, %v2019
    %v2200 = vpack.c.b16 %v2028, %v2024
    %v2201 = vpack.c.b16 %v2029, %v2025
    %v2202 = vpack.c.b16 %v2030, %v2026
    %v2203 = vpack.c.b16 %v2031, %v2027
    %v2204 = vpack.c.b16 %v2036, %v2032
    %v2205 = vpack.c.b16 %v2037, %v2033
    %v2206 = vpack.c.b16 %v2038, %v2034
    %v2207 = vpack.c.b16 %v2039, %v2035
    %v2208 = vpack.c.b16 %v2044, %v2040
    %v2209 = vpack.c.b16 %v2045, %v2041
    %v2210 = vpack.c.b16 %v2046, %v2042
    %v2211 = vpack.c.b16 %v2047, %v2043
    %v2212 = vpack.c.b16 %v2052, %v2048
    %v2213 = vpack.c.b16 %v2053, %v2049
    %v2214 = vpack.c.b16 %v2054, %v2050
    %v2215 = vpack.c.b16 %v2055, %v2051
    %v2216 = vpack.c.b16 %v2060, %v2056
    %v2217 = vpack.c.b16 %v2061, %v2057
    %v2218 = vpack.c.b16 %v2062, %v2058
    %v2219 = vpack.c.b16 %v2063, %v2059
    %v2220 = vpack.c.b16 %v2068, %v2064
    %v2221 = vpack.c.b16 %v2069, %v2065
    %v2222 = vpack.c.b16 %v2070, %v2066
    %v2223 = vpack.c.b16 %v2071, %v2067
    %v2224 = vpack.c.b16 %v2076, %v2072
    %v2225 = vpack.c.b16 %v2077, %v2073
    %v2226 = vpack.c.b16 %v2078, %v2074
    %v2227 = vpack.c.b16 %v2079, %v2075
    %v2228 = vpack.c.b16 %v2084, %v2080
    %v2229 = vpack.c.b16 %v2085, %v2081
    %v2230 = vpack.c.b16 %v2086, %v2082
    %v2231 = vpack.c.b16 %v2087, %v2083
    %v2232 = vpack.c.b16 %v2092, %v2088
    %v2233 = vpack.c.b16 %v2093, %v2089
    %v2234 = vpack.c.b16 %v2094, %v2090
    %v2235 = vpack.c.b16 %v2095, %v2091
    %v2236 = vpack.c.b16 %v2100, %v2096
    %v2237 = vpack.c.b16 %v2101, %v2097
    %v2238 = vpack.c.b16 %v2102, %v2098
    %v2239 = vpack.c.b16 %v2103, %v2099
    %v2240 = vpack.c.b16 %v2108, %v2104
    %v2241 = vpack.c.b16 %v2109, %v2105
    %v2242 = vpack.c.b16 %v2110, %v2106
    %v2243 = vpack.c.b16 %v2111, %v2107
    %v2244 = vpack.c.b16 %v2116, %v2112
    %v2245 = vpack.c.b16 %v2117, %v2113
    %v2246 = vpack.c.b16 %v2118, %v2114
    %v2247 = vpack.c.b16 %v2119, %v2115
    %2376 = vmatprep.subr.bf16.mxu0 %v2149
    %2377 = vmatpush1.bf16.msra.mxu0 %v2148
    %2378 = vmatprep.subr.bf16.mxu0 %v2145
    %2379 = vmatpush1.bf16.msra.mxu0 %v2144
    %2380 = vmatprep.subr.bf16.mxu0 %v2141
    %2381 = vmatpush1.bf16.msra.mxu0 %v2140
    %2382 = vmatprep.subr.bf16.mxu0 %v2137
    %2383 = vmatpush1.bf16.msra.mxu0 %v2136
    %2384 = vmatprep.subr.bf16.mxu0 %v2133
    %2385 = vmatpush1.bf16.msra.mxu0 %v2132
    %2386 = vmatprep.subr.bf16.mxu0 %v2129
    %2387 = vmatpush1.bf16.msra.mxu0 %v2128
    %2388 = vmatprep.subr.bf16.mxu0 %v2125
    %2389 = vmatpush1.bf16.msra.mxu0 %v2124
    %2390 = vmatprep.subr.bf16.mxu0 %v2121
    %2391 = vmatpush1.bf16.msra.mxu0 %v2120
    %2392 = vmatprep.subr.bf16.mxu0 %v2181
    %2393 = vmatpush2.bf16.msra.mxu0 %v2180
    %2394 = vmatprep.subr.bf16.mxu0 %v2177
    %2395 = vmatpush2.bf16.msra.mxu0 %v2176
    %2396 = vmatprep.subr.bf16.mxu0 %v2173
    %2397 = vmatpush2.bf16.msra.mxu0 %v2172
    %2398 = vmatprep.subr.bf16.mxu0 %v2169
    %2399 = vmatpush2.bf16.msra.mxu0 %v2168
    %2400 = vmatprep.subr.bf16.mxu0 %v2165
    %2401 = vmatpush2.bf16.msra.mxu0 %v2164
    %2402 = vmatprep.subr.bf16.mxu0 %v2161
    %2403 = vmatpush2.bf16.msra.mxu0 %v2160
    %2404 = vmatprep.subr.bf16.mxu0 %v2157
    %2405 = vmatpush2.bf16.msra.mxu0 %v2156
    %2406 = vmatprep.subr.bf16.mxu0 %v2153
    %2407 = vmatpush2.bf16.msra.mxu0 %v2152
    %2408 = vmatprep.mubr.bf16.mxu0 %v1583
    %2409 = vmatmul.mubr.bf16.gmra.mxu0 %v1582
    %v2410 = vpop.f32.mrf.mxu0
    %v2411 = vadd.f32 %v1719, %v2410
    %v2412 = vpop.f32.mrf.mxu0
    %v2413 = vadd.f32 %v1723, %v2412
    %v2414 = vpop.f32.mrf.mxu0
    %v2415 = vpop.f32.mrf.mxu0
    %2416 = vdwg.mxu0
    %2417 = vmatprep.subr.bf16.mxu0 %v2213
    %2418 = vmatpush1.bf16.msra.mxu0 %v2212
    %2419 = vmatprep.subr.bf16.mxu0 %v2209
    %2420 = vmatpush1.bf16.msra.mxu0 %v2208
    %2421 = vmatprep.subr.bf16.mxu0 %v2205
    %2422 = vmatpush1.bf16.msra.mxu0 %v2204
    %2423 = vmatprep.subr.bf16.mxu0 %v2201
    %2424 = vmatpush1.bf16.msra.mxu0 %v2200
    %2425 = vmatprep.subr.bf16.mxu0 %v2197
    %2426 = vmatpush1.bf16.msra.mxu0 %v2196
    %2427 = vmatprep.subr.bf16.mxu0 %v2193
    %2428 = vmatpush1.bf16.msra.mxu0 %v2192
    %2429 = vmatprep.subr.bf16.mxu0 %v2189
    %2430 = vmatpush1.bf16.msra.mxu0 %v2188
    %2431 = vmatprep.subr.bf16.mxu0 %v2185
    %2432 = vmatpush1.bf16.msra.mxu0 %v2184
    %2433 = vmatprep.subr.bf16.mxu0 %v2245
    %2434 = vmatpush2.bf16.msra.mxu0 %v2244
    %2435 = vmatprep.subr.bf16.mxu0 %v2241
    %2436 = vmatpush2.bf16.msra.mxu0 %v2240
    %2437 = vmatprep.subr.bf16.mxu0 %v2237
    %2438 = vmatpush2.bf16.msra.mxu0 %v2236
    %2439 = vmatprep.subr.bf16.mxu0 %v2233
    %2440 = vmatpush2.bf16.msra.mxu0 %v2232
    %2441 = vmatprep.subr.bf16.mxu0 %v2229
    %2442 = vmatpush2.bf16.msra.mxu0 %v2228
    %2443 = vmatprep.subr.bf16.mxu0 %v2225
    %2444 = vmatpush2.bf16.msra.mxu0 %v2224
    %2445 = vmatprep.subr.bf16.mxu0 %v2221
    %2446 = vmatpush2.bf16.msra.mxu0 %v2220
    %2447 = vmatprep.subr.bf16.mxu0 %v2217
    %2448 = vmatpush2.bf16.msra.mxu0 %v2216
    %2449 = vmatprep.mubr.bf16.mxu0 %v1585
    %2450 = vmatmul.mubr.bf16.gmra.mxu0 %v1584
    %v2451 = vpop.f32.mrf.mxu0
    %v2452 = vadd.f32 %v2411, %v2451
    %v2453 = vpop.f32.mrf.mxu0
    %v2454 = vadd.f32 %v2413, %v2453
    %v2455 = vpop.f32.mrf.mxu0
    %v2456 = vpop.f32.mrf.mxu0
    %2457 = vdwg.mxu0
    %2458 = vmatprep.subr.bf16.mxu0 %v2151
    %2459 = vmatpush1.bf16.msra.mxu0 %v2150
    %2460 = vmatprep.subr.bf16.mxu0 %v2147
    %2461 = vmatpush1.bf16.msra.mxu0 %v2146
    %2462 = vmatprep.subr.bf16.mxu0 %v2143
    %2463 = vmatpush1.bf16.msra.mxu0 %v2142
    %2464 = vmatprep.subr.bf16.mxu0 %v2139
    %2465 = vmatpush1.bf16.msra.mxu0 %v2138
    %2466 = vmatprep.subr.bf16.mxu0 %v2135
    %2467 = vmatpush1.bf16.msra.mxu0 %v2134
    %2468 = vmatprep.subr.bf16.mxu0 %v2131
    %2469 = vmatpush1.bf16.msra.mxu0 %v2130
    %2470 = vmatprep.subr.bf16.mxu0 %v2127
    %2471 = vmatpush1.bf16.msra.mxu0 %v2126
    %2472 = vmatprep.subr.bf16.mxu0 %v2123
    %2473 = vmatpush1.bf16.msra.mxu0 %v2122
    %2474 = vmatprep.subr.bf16.mxu0 %v2183
    %2475 = vmatpush2.bf16.msra.mxu0 %v2182
    %2476 = vmatprep.subr.bf16.mxu0 %v2179
    %2477 = vmatpush2.bf16.msra.mxu0 %v2178
    %2478 = vmatprep.subr.bf16.mxu0 %v2175
    %2479 = vmatpush2.bf16.msra.mxu0 %v2174
    %2480 = vmatprep.subr.bf16.mxu0 %v2171
    %2481 = vmatpush2.bf16.msra.mxu0 %v2170
    %2482 = vmatprep.subr.bf16.mxu0 %v2167
    %2483 = vmatpush2.bf16.msra.mxu0 %v2166
    %2484 = vmatprep.subr.bf16.mxu0 %v2163
    %2485 = vmatpush2.bf16.msra.mxu0 %v2162
    %2486 = vmatprep.subr.bf16.mxu0 %v2159
    %2487 = vmatpush2.bf16.msra.mxu0 %v2158
    %2488 = vmatprep.subr.bf16.mxu0 %v2155
    %2489 = vmatpush2.bf16.msra.mxu0 %v2154
    %2490 = vmatprep.mubr.bf16.mxu0 %v1583
    %2491 = vmatmul.mubr.bf16.gmra.mxu0 %v1582
    %v2492 = vpop.f32.mrf.mxu0
    %v2493 = vadd.f32 %v1727, %v2492
    %v2494 = vpop.f32.mrf.mxu0
    %v2495 = vadd.f32 %v1731, %v2494
    %v2496 = vpop.f32.mrf.mxu0
    %v2497 = vpop.f32.mrf.mxu0
    %2498 = vdwg.mxu0
    %2499 = vmatprep.subr.bf16.mxu0 %v2215
    %2500 = vmatpush1.bf16.msra.mxu0 %v2214
    %2501 = vmatprep.subr.bf16.mxu0 %v2211
    %2502 = vmatpush1.bf16.msra.mxu0 %v2210
    %2503 = vmatprep.subr.bf16.mxu0 %v2207
    %2504 = vmatpush1.bf16.msra.mxu0 %v2206
    %2505 = vmatprep.subr.bf16.mxu0 %v2203
    %2506 = vmatpush1.bf16.msra.mxu0 %v2202
    %2507 = vmatprep.subr.bf16.mxu0 %v2199
    %2508 = vmatpush1.bf16.msra.mxu0 %v2198
    %2509 = vmatprep.subr.bf16.mxu0 %v2195
    %2510 = vmatpush1.bf16.msra.mxu0 %v2194
    %2511 = vmatprep.subr.bf16.mxu0 %v2191
    %2512 = vmatpush1.bf16.msra.mxu0 %v2190
    %2513 = vmatprep.subr.bf16.mxu0 %v2187
    %2514 = vmatpush1.bf16.msra.mxu0 %v2186
    %2515 = vmatprep.subr.bf16.mxu0 %v2247
    %2516 = vmatpush2.bf16.msra.mxu0 %v2246
    %2517 = vmatprep.subr.bf16.mxu0 %v2243
    %2518 = vmatpush2.bf16.msra.mxu0 %v2242
    %2519 = vmatprep.subr.bf16.mxu0 %v2239
    %2520 = vmatpush2.bf16.msra.mxu0 %v2238
    %2521 = vmatprep.subr.bf16.mxu0 %v2235
    %2522 = vmatpush2.bf16.msra.mxu0 %v2234
    %2523 = vmatprep.subr.bf16.mxu0 %v2231
    %2524 = vmatpush2.bf16.msra.mxu0 %v2230
    %2525 = vmatprep.subr.bf16.mxu0 %v2227
    %2526 = vmatpush2.bf16.msra.mxu0 %v2226
    %2527 = vmatprep.subr.bf16.mxu0 %v2223
    %2528 = vmatpush2.bf16.msra.mxu0 %v2222
    %2529 = vmatprep.subr.bf16.mxu0 %v2219
    %2530 = vmatpush2.bf16.msra.mxu0 %v2218
    %2531 = vmatprep.mubr.bf16.mxu0 %v1585
    %2532 = vmatmul.mubr.bf16.gmra.mxu0 %v1584
    %v2533 = vpop.f32.mrf.mxu0
    %v2534 = vadd.f32 %v2493, %v2533
    %v2535 = vpop.f32.mrf.mxu0
    %v2536 = vadd.f32 %v2495, %v2535
    %v2537 = vpop.f32.mrf.mxu0
    %v2538 = vpop.f32.mrf.mxu0
    %2539 = vdwg.mxu0
    %v2544 = vcombine.low %v2452, %v2454
    %v2545 = vcombine.low %v2534, %v2536
    %v2547 = vunpack.c.l.s4 1983009808
    %v2548 = vunpack.c.0.s8 %v2547
    %v2549 = vlaneseq
    %v2550 = vshrl.u32 %v2549, 7
    %v2551 = vsub.s32 %v2548, %v2550
    %v2552 = vrot.slane %v2544, %v2551
    %v2554 = vunpack.c.l.s4 1983009808
    %v2555 = vunpack.c.0.s8 %v2554
    %v2556 = vlaneseq
    %v2557 = vshrl.u32 %v2556, 7
    %v2558 = vsub.s32 %v2555, %v2557
    %v2559 = vrot.slane %v2545, %v2558
    %v2560 = vcombine.low %v2552, %v2559
    %2562 = vst [vmem:[#allocation10] sm:$0xff] %v2560
    // Predicated region
    $region42: #{tpu_custom_call.1} parent=1 // pred_check
      _
    $region43: #{tpu_custom_call.1} parent=1 // pred_check_branch
      %2564 = sbr.rel (0) target = $region45
    $region44: #{tpu_custom_call.1} parent=1 // pred_region
      %s2566 = ssub.s32 128, 128
      %2567 = vsyncadd [#allocation4], %s2566
      %s2569 = sshll.u32 [#allocation10], 4
      %s2570 = int_to_ptr.vmem [resolvable:$true] %s2569
      %2572 = dma.vmem_to_hbm [thread:$0]  %s2570, 128, %s6, [#allocation4]
    $region45: #{tpu_custom_call.1} parent=1 // pred_fallthru
      _
    // Predicated region
    $region46: #{tpu_custom_call.1} parent=1 // pred_check
      _
    $region47: #{tpu_custom_call.1} parent=1 // pred_check_branch
      %2574 = sbr.rel (0) target = $region49
    $region48: #{tpu_custom_call.1} parent=1 // pred_region
      %2575 = dma.done [#allocation4], 128
    $region49: #{tpu_custom_call.1} parent=1 // pred_fallthru
      _
    %2576 = vsyncpa [#allocation3], 1
    %2577 = vsyncpa [#allocation6], 1
    %2578 = vsyncpa [#allocation9], 1
    %2579 = vsyncpa [#allocation4], 1

</llo_original>
